<compile_context>
chip_gen: v6e
topology: v6e:2x2x1
jax: 0.10.0
libtpu: 0.0.40
codegen_flags: <defaults>
</compile_context>

<pallas_src>
import jax
import jax.numpy as jnp
from jax import lax
from jax.experimental import pallas as pl
from jax.experimental.pallas import tpu as pltpu


# ---------------------------------------------------------------------------
# Kernel
# ---------------------------------------------------------------------------
def _sentence_embed_kernel(x_ref, mask_ref, w_ref, b_ref, o_ref):
    """One grid step = TB batch rows.

    x_ref:    (TB, S, H)  embedded tokens, bf16 (H lane-padded, S 8-padded)
    mask_ref: (TB, S)     attention mask, f32
    w_ref:    (H, H)      encoder dense weight, bf16
    b_ref:    (1, H)      encoder dense bias, f32
    o_ref:    (TB, H)     normalized sentence embeddings, f32
    """
    TB, S, H = x_ref.shape

    # --- synthetic encoder: one dense + tanh over every token --------------
    # Single tall (TB*S, H) x (H, H) matmul; bf16 operands straight from VMEM,
    # f32 accumulation on the MXU.
    x2d = x_ref[...].reshape(TB * S, H)                          # bf16
    h = jnp.dot(x2d, w_ref[...], preferred_element_type=jnp.float32)
    h = jnp.tanh(h + b_ref[...]).reshape(TB, S, H)               # (TB,S,H) f32

    # --- masked mean pooling: VPU multiply + sublane reduce (MXU stays free)
    m = mask_ref[...]                                            # (TB, S) f32
    summed = jnp.sum(h * m[:, :, None], axis=1)                  # (TB, H) f32

    count = jnp.sum(m, axis=1, keepdims=True)                    # (TB, 1)
    # approx reciprocal is fine: the per-row scale cancels in L2 normalize.
    inv_count = pl.reciprocal(jnp.maximum(count, jnp.float32(1e-9)), approx=True)
    emb = summed * inv_count                                     # (TB, H)

    # --- F.normalize(p=2, dim=1, eps=1e-12):  emb / max(||emb||, 1e-12) -----
    sq = jnp.sum(emb * emb, axis=1, keepdims=True)               # (TB, 1)
    inv_norm = lax.rsqrt(jnp.maximum(sq, jnp.float32(1e-24)))    # 1/max(||e||,1e-12)
    o_ref[...] = (emb * inv_norm).astype(o_ref.dtype)


# ---------------------------------------------------------------------------
# Wrapper helpers
# ---------------------------------------------------------------------------
def _round_up(n, m):
    return pl.cdiv(n, m) * m


def _pad_to(x, shape):
    """Zero-pad trailing edges to `shape`; no-op (no extra HBM pass) if aligned."""
    pads = [(0, t - s) for s, t in zip(x.shape, shape)]
    if any(p[1] for p in pads):
        x = jnp.pad(x, pads)
    return x


def _vmem_budget_bytes():
    """~75% of physical per-core VMEM (96 MiB on v5e/v6e, 48 MiB on v7x)."""
    try:
        cap = pltpu.get_tpu_info().vmem_capacity_bytes
    except Exception:
        cap = 64 * 1024 * 1024  # conservative (v7x-sized) fallback
    return int(cap * 3 // 4)


def _pick_block_b(Sp, Hp, budget_bytes, max_block_b=128):
    """Largest batch tile (multiple of 8) whose working set fits the budget."""
    # Per extra batch row: x double-buffered bf16, f32 h temporary,
    # mask double-buffered f32, output double-buffered f32.
    per_row = 2 * Sp * Hp * 2 + Sp * Hp * 4 + 2 * Sp * 4 + 2 * Hp * 4
    # Weight/bias (counted at 2 buffers to stay conservative even if the
    # single-buffer request is ignored).
    fixed = 2 * Hp * Hp * 2 + 2 * Hp * 4
    tb = max_block_b
    while tb > 8 and fixed + tb * per_row > budget_bytes:
        tb -= 8
    return max(tb, 8)


# ---------------------------------------------------------------------------
# Public entry point
# ---------------------------------------------------------------------------
def sentence_embedding(token_embeds, attention_mask, w, b, *, block_b=None):
    """token_embeds: [B, S, H], attention_mask: [B, S] -> [B, H] f32."""
    B, S, H = token_embeds.shape

    # TPU-friendly shapes: hidden -> multiple of 128 (lanes), seq -> multiple
    # of 8 (sublanes), batch -> multiple of the chosen batch tile.
    Sp = _round_up(S, 8)
    Hp = _round_up(H, 128)

    vmem_budget = _vmem_budget_bytes()
    if block_b is None:
        block_b = _pick_block_b(Sp, Hp, vmem_budget)
        if B > 8:
            # Keep >= 2 grid steps so dimension_semantics=("parallel",) can
            # shard the batch axis across both v7x TensorCores.
            block_b = min(block_b, _round_up(pl.cdiv(B, 2), 8))
    block_b = int(max(8, _round_up(block_b, 8)))
    Bp = _round_up(B, block_b)

    # Fused pad + cast: bf16 activations/weight (half the DMA), f32 mask/bias.
    x = _pad_to(token_embeds.astype(jnp.bfloat16), (Bp, Sp, Hp))
    m = _pad_to(attention_mask.astype(jnp.float32), (Bp, Sp))
    wp = _pad_to(w.astype(jnp.bfloat16), (Hp, Hp))
    bp = _pad_to(b.astype(jnp.float32).reshape(1, H), (1, Hp))

    def _call(single_buffer_weights):
        # Weight & bias are grid-invariant (index_map always (0,0)); request a
        # single VMEM buffer for them so a large (Hp,Hp) weight is not held
        # twice (matters at Hp>=2048 on v7x's 64 MiB VMEM).
        inv_kwargs = (
            dict(pipeline_mode=pl.Buffered(buffer_count=1))
            if single_buffer_weights else {}
        )
        grid_spec = pltpu.PrefetchScalarGridSpec(
            num_scalar_prefetch=0,
            grid=(Bp // block_b,),
            in_specs=[
                pl.BlockSpec((block_b, Sp, Hp), lambda i: (i, 0, 0)),
                pl.BlockSpec((block_b, Sp), lambda i: (i, 0)),
                pl.BlockSpec((Hp, Hp), lambda i: (0, 0), **inv_kwargs),
                pl.BlockSpec((1, Hp), lambda i: (0, 0), **inv_kwargs),
            ],
            out_specs=pl.BlockSpec((block_b, Hp), lambda i: (i, 0)),
        )
        return pl.pallas_call(
            _sentence_embed_kernel,
            out_shape=jax.ShapeDtypeStruct((Bp, Hp), jnp.float32),
            grid_spec=grid_spec,
            compiler_params=pltpu.CompilerParams(
                dimension_semantics=("parallel",),
                vmem_limit_bytes=vmem_budget,
            ),
        )(x, m, wp, bp)

    try:
        out = _call(True)
    except Exception:
        # pl.Buffered(1) on a pallas_call BlockSpec not supported on this jax
        # version: fall back to default double-buffering (correctness first).
        out = _call(False)
    return out[:B, :H]


# ---------------------------------------------------------------------------
# Pure-JAX reference (same bf16 MXU dtype as the kernel)
# ---------------------------------------------------------------------------
def reference(token_embeds, attention_mask, w, b):
    xb = token_embeds.astype(jnp.bfloat16)
    wb = w.astype(jnp.bfloat16)
    h = jnp.tanh(
        jnp.einsum("bsh,hd->bsd", xb, wb, preferred_element_type=jnp.float32)
        + b.astype(jnp.float32))
    m = attention_mask[..., None].astype(jnp.float32)
    emb = jnp.sum(h * m, axis=1) / jnp.clip(jnp.sum(m, axis=1), 1e-9, None)
    norm = jnp.linalg.norm(emb, axis=1, keepdims=True)
    return emb / jnp.maximum(norm, 1e-12)


if __name__ == "__main__":
    B, S, H, VOCAB = 16, 16, 32, 64

    key = jax.random.PRNGKey(0)
    k_emb, k_w, k_b, k_ids, k_len = jax.random.split(key, 5)

    # Deterministic synthetic parameters (stand-in for AutoModel weights).
    embed_table = jax.random.normal(k_emb, (VOCAB, H), dtype=jnp.float32) * 0.1
    w = jax.random.normal(k_w, (H, H), dtype=jnp.float32) * 0.1
    b = jax.random.normal(k_b, (H,), dtype=jnp.float32) * 0.1

    # Synthetic inputs: input_ids + attention_mask with variable padding.
    input_ids = jax.random.randint(k_ids, (B, S), 0, VOCAB)
    lengths = jax.random.randint(k_len, (B,), 1, S + 1)
    attention_mask = (jnp.arange(S)[None, :] < lengths[:, None]).astype(jnp.float32)

    # Glue: embedding lookup (gather) outside the kernel.
    token_embeds = jnp.take(embed_table, input_ids, axis=0)       # [B, S, H]

    out = sentence_embedding(token_embeds, attention_mask, w, b)
    out = jax.block_until_ready(out)

    ref = reference(token_embeds, attention_mask, w, b)
    assert out.shape == (B, H)
    max_diff = float(jnp.max(jnp.abs(out - ref)))
    assert jnp.allclose(out, ref, atol=1e-3, rtol=1e-3), (
        f"mismatch vs reference, max abs diff = {max_diff}")

    print("KERNEL_OK")
</pallas_src>

<mosaic_0001>
module attributes {stable_mosaic.version = 11 : i64} {
  func.func @_sentence_embed_kernel(%arg0: i32, %arg1: memref<8x16x128xbf16, #tpu.memory_space<vmem>>, %arg2: memref<8x16xf32, #tpu.memory_space<vmem>>, %arg3: memref<128x128xbf16, #tpu.memory_space<vmem>>, %arg4: memref<1x128xf32, #tpu.memory_space<vmem>>, %arg5: memref<8x128xf32, #tpu.memory_space<vmem>>) attributes {dimension_semantics = [#tpu.dimension_semantics<parallel>], iteration_bounds = array<i64: 2>, scalar_prefetch = 0 : i64, scratch_operands = 0 : i64, tpu.core_type = #tpu.core_type<tc>, window_params = [{transform_indices = @transform_0, window_bounds = array<i64: 8, 16, 128>}, {transform_indices = @transform_1, window_bounds = array<i64: 8, 16>}, {pipeline_mode = #tpu.pipeline_mode<synchronous>, transform_indices = @transform_2, window_bounds = array<i64: 128, 128>}, {pipeline_mode = #tpu.pipeline_mode<synchronous>, transform_indices = @transform_3, window_bounds = array<i64: 1, 128>}, {transform_indices = @transform_4, window_bounds = array<i64: 8, 128>}]} {
    %c0 = arith.constant 0 : index
    %c0_0 = arith.constant 0 : index
    %c0_1 = arith.constant 0 : index
    %0 = vector.load %arg1[%c0, %c0_0, %c0_1] : memref<8x16x128xbf16, #tpu.memory_space<vmem>>, vector<8x16x128xbf16>
    %1 = vector.shape_cast %0 : vector<8x16x128xbf16> to vector<128x128xbf16>
    %c0_2 = arith.constant 0 : index
    %c0_3 = arith.constant 0 : index
    %2 = vector.load %arg3[%c0_2, %c0_3] : memref<128x128xbf16, #tpu.memory_space<vmem>>, vector<128x128xbf16>
    %cst = arith.constant dense<0.000000e+00> : vector<128x128xf32>
    %3 = tpu.matmul %1, %2, %cst {dimension_numbers = #tpu.dot_dimension_numbers<[1], [0], [0], [1], [0, 0, 1, 1], [], []>} : vector<128x128xbf16>, vector<128x128xbf16>, vector<128x128xf32> -> vector<128x128xf32>
    %c0_4 = arith.constant 0 : index
    %c0_5 = arith.constant 0 : index
    %4 = vector.load %arg4[%c0_4, %c0_5] : memref<1x128xf32, #tpu.memory_space<vmem>>, vector<1x128xf32>
    %5 = vector.broadcast %4 : vector<1x128xf32> to vector<128x128xf32>
    %6 = arith.addf %3, %5 : vector<128x128xf32>
    %7 = math.tanh %6 : vector<128x128xf32>
    %8 = vector.shape_cast %7 : vector<128x128xf32> to vector<8x16x128xf32>
    %c0_6 = arith.constant 0 : index
    %c0_7 = arith.constant 0 : index
    %9 = vector.load %arg2[%c0_6, %c0_7] : memref<8x16xf32, #tpu.memory_space<vmem>>, vector<8x16xf32>
    %10 = vector.shape_cast %9 : vector<8x16xf32> to vector<8x16x1xf32>
    %11 = vector.broadcast %10 : vector<8x16x1xf32> to vector<8x16x128xf32>
    %12 = arith.mulf %8, %11 : vector<8x16x128xf32>
    %cst_8 = arith.constant dense<0.000000e+00> : vector<8x128xf32>
    %13 = vector.multi_reduction <add>, %12, %cst_8 [1] : vector<8x16x128xf32> to vector<8x128xf32>
    %cst_9 = arith.constant dense<0.000000e+00> : vector<8xf32>
    %14 = vector.multi_reduction <add>, %9, %cst_9 [1] : vector<8x16xf32> to vector<8xf32>
    %15 = vector.shape_cast %14 : vector<8xf32> to vector<8x1xf32>
    %cst_10 = arith.constant 9.99999971E-10 : f32
    %16 = vector.broadcast %cst_10 : f32 to vector<8x1xf32>
    %17 = arith.maximumf %15, %16 : vector<8x1xf32>
    %18 = tpu.reciprocal %17 {approx = true} : vector<8x1xf32> -> vector<8x1xf32>
    %19 = vector.broadcast %18 : vector<8x1xf32> to vector<8x128xf32>
    %20 = arith.mulf %13, %19 : vector<8x128xf32>
    %21 = arith.mulf %20, %20 : vector<8x128xf32>
    %cst_11 = arith.constant dense<0.000000e+00> : vector<8xf32>
    %22 = vector.multi_reduction <add>, %21, %cst_11 [1] : vector<8x128xf32> to vector<8xf32>
    %23 = vector.shape_cast %22 : vector<8xf32> to vector<8x1xf32>
    %cst_12 = arith.constant 1.000000e-24 : f32
    %24 = vector.broadcast %cst_12 : f32 to vector<8x1xf32>
    %25 = arith.maximumf %23, %24 : vector<8x1xf32>
    %26 = math.rsqrt %25 : vector<8x1xf32>
    %27 = vector.broadcast %26 : vector<8x1xf32> to vector<8x128xf32>
    %28 = arith.mulf %20, %27 : vector<8x128xf32>
    %c0_13 = arith.constant 0 : index
    %c0_14 = arith.constant 0 : index
    %29 = vector.load %arg5[%c0_13, %c0_14] : memref<8x128xf32, #tpu.memory_space<vmem>>, vector<8x128xf32>
    tpu.vector_store %arg5[%c0_13, %c0_14], %28 {strides = array<i32>} : memref<8x128xf32, #tpu.memory_space<vmem>>, vector<8x128xf32>,
    return
  }
  func.func @transform_0(%arg0: i32) -> (i32, i32, i32) {
    %c0_i32 = arith.constant 0 : i32
    %c0_i32_0 = arith.constant 0 : i32
    %c0_i32_1 = arith.constant 0 : i32
    return %arg0, %c0_i32, %c0_i32_0 : i32, i32, i32
  }
  func.func @transform_1(%arg0: i32) -> (i32, i32) {
    %c0_i32 = arith.constant 0 : i32
    %c0_i32_0 = arith.constant 0 : i32
    return %arg0, %c0_i32 : i32, i32
  }
  func.func @transform_2(%arg0: i32) -> (i32, i32) {
    %c0_i32 = arith.constant 0 : i32
    %c0_i32_0 = arith.constant 0 : i32
    %c0_i32_1 = arith.constant 0 : i32
    return %c0_i32, %c0_i32_0 : i32, i32
  }
  func.func @transform_3(%arg0: i32) -> (i32, i32) {
    %c0_i32 = arith.constant 0 : i32
    %c0_i32_0 = arith.constant 0 : i32
    %c0_i32_1 = arith.constant 0 : i32
    return %c0_i32, %c0_i32_0 : i32, i32
  }
  func.func @transform_4(%arg0: i32) -> (i32, i32) {
    %c0_i32 = arith.constant 0 : i32
    %c0_i32_0 = arith.constant 0 : i32
    return %arg0, %c0_i32 : i32, i32
  }
}

module attributes {stable_mosaic.version = 11 : i64} {
  func.func @_sentence_embed_kernel(%arg0: i32, %arg1: memref<8x16x128xbf16, #tpu.memory_space<vmem>>, %arg2: memref<8x16xf32, #tpu.memory_space<vmem>>, %arg3: memref<128x128xbf16, #tpu.memory_space<vmem>>, %arg4: memref<1x128xf32, #tpu.memory_space<vmem>>, %arg5: memref<8x128xf32, #tpu.memory_space<vmem>>) attributes {dimension_semantics = [#tpu.dimension_semantics<parallel>], iteration_bounds = array<i64: 2>, scalar_prefetch = 0 : i64, scratch_operands = 0 : i64, tpu.core_type = #tpu.core_type<tc>, window_params = [{transform_indices = @transform_0, window_bounds = array<i64: 8, 16, 128>}, {transform_indices = @transform_1, window_bounds = array<i64: 8, 16>}, {pipeline_mode = #tpu.pipeline_mode<synchronous>, transform_indices = @transform_2, window_bounds = array<i64: 128, 128>}, {pipeline_mode = #tpu.pipeline_mode<synchronous>, transform_indices = @transform_3, window_bounds = array<i64: 1, 128>}, {transform_indices = @transform_4, window_bounds = array<i64: 8, 128>}]} {
    %c0 = arith.constant 0 : index
    %c0_0 = arith.constant 0 : index
    %c0_1 = arith.constant 0 : index
    %0 = vector.load %arg1[%c0, %c0_0, %c0_1] : memref<8x16x128xbf16, #tpu.memory_space<vmem>>, vector<8x16x128xbf16>
    %1 = vector.shape_cast %0 : vector<8x16x128xbf16> to vector<128x128xbf16>
    %c0_2 = arith.constant 0 : index
    %c0_3 = arith.constant 0 : index
    %2 = vector.load %arg3[%c0_2, %c0_3] : memref<128x128xbf16, #tpu.memory_space<vmem>>, vector<128x128xbf16>
    %cst = arith.constant dense<0.000000e+00> : vector<128x128xf32>
    %3 = tpu.matmul %1, %2, %cst {dimension_numbers = #tpu.dot_dimension_numbers<[1], [0], [0], [1], [0, 0, 1, 1], [], []>} : vector<128x128xbf16>, vector<128x128xbf16>, vector<128x128xf32> -> vector<128x128xf32>
    %c0_4 = arith.constant 0 : index
    %c0_5 = arith.constant 0 : index
    %4 = vector.load %arg4[%c0_4, %c0_5] : memref<1x128xf32, #tpu.memory_space<vmem>>, vector<1x128xf32>
    %5 = vector.broadcast %4 : vector<1x128xf32> to vector<128x128xf32>
    %6 = arith.addf %3, %5 : vector<128x128xf32>
    %7 = math.tanh %6 : vector<128x128xf32>
    %8 = vector.shape_cast %7 : vector<128x128xf32> to vector<8x16x128xf32>
    %c0_6 = arith.constant 0 : index
    %c0_7 = arith.constant 0 : index
    %9 = vector.load %arg2[%c0_6, %c0_7] : memref<8x16xf32, #tpu.memory_space<vmem>>, vector<8x16xf32>
    %10 = vector.shape_cast %9 : vector<8x16xf32> to vector<8x16x1xf32>
    %11 = vector.broadcast %10 : vector<8x16x1xf32> to vector<8x16x128xf32>
    %12 = arith.mulf %8, %11 : vector<8x16x128xf32>
    %cst_8 = arith.constant dense<0.000000e+00> : vector<8x128xf32>
    %13 = vector.multi_reduction <add>, %12, %cst_8 [1] : vector<8x16x128xf32> to vector<8x128xf32>
    %cst_9 = arith.constant dense<0.000000e+00> : vector<8xf32>
    %14 = vector.multi_reduction <add>, %9, %cst_9 [1] : vector<8x16xf32> to vector<8xf32>
    %15 = vector.shape_cast %14 : vector<8xf32> to vector<8x1xf32>
    %cst_10 = arith.constant 9.99999971E-10 : f32
    %16 = vector.broadcast %cst_10 : f32 to vector<8x1xf32>
    %17 = arith.maximumf %15, %16 : vector<8x1xf32>
    %18 = tpu.reciprocal %17 {approx = true} : vector<8x1xf32> -> vector<8x1xf32>
    %19 = vector.broadcast %18 : vector<8x1xf32> to vector<8x128xf32>
    %20 = arith.mulf %13, %19 : vector<8x128xf32>
    %21 = arith.mulf %20, %20 : vector<8x128xf32>
    %cst_11 = arith.constant dense<0.000000e+00> : vector<8xf32>
    %22 = vector.multi_reduction <add>, %21, %cst_11 [1] : vector<8x128xf32> to vector<8xf32>
    %23 = vector.shape_cast %22 : vector<8xf32> to vector<8x1xf32>
    %cst_12 = arith.constant 1.000000e-24 : f32
    %24 = vector.broadcast %cst_12 : f32 to vector<8x1xf32>
    %25 = arith.maximumf %23, %24 : vector<8x1xf32>
    %26 = math.rsqrt %25 : vector<8x1xf32>
    %27 = vector.broadcast %26 : vector<8x1xf32> to vector<8x128xf32>
    %28 = arith.mulf %20, %27 : vector<8x128xf32>
    %c0_13 = arith.constant 0 : index
    %c0_14 = arith.constant 0 : index
    %29 = vector.load %arg5[%c0_13, %c0_14] : memref<8x128xf32, #tpu.memory_space<vmem>>, vector<8x128xf32>
    tpu.vector_store %arg5[%c0_13, %c0_14], %28 {strides = array<i32>} : memref<8x128xf32, #tpu.memory_space<vmem>>, vector<8x128xf32>,
    return
  }
  func.func @transform_0(%arg0: i32) -> (i32, i32, i32) {
    %c0_i32 = arith.constant 0 : i32
    %c0_i32_0 = arith.constant 0 : i32
    %c0_i32_1 = arith.constant 0 : i32
    return %arg0, %c0_i32, %c0_i32_0 : i32, i32, i32
  }
  func.func @transform_1(%arg0: i32) -> (i32, i32) {
    %c0_i32 = arith.constant 0 : i32
    %c0_i32_0 = arith.constant 0 : i32
    return %arg0, %c0_i32 : i32, i32
  }
  func.func @transform_2(%arg0: i32) -> (i32, i32) {
    %c0_i32 = arith.constant 0 : i32
    %c0_i32_0 = arith.constant 0 : i32
    %c0_i32_1 = arith.constant 0 : i32
    return %c0_i32, %c0_i32_0 : i32, i32
  }
  func.func @transform_3(%arg0: i32) -> (i32, i32) {
    %c0_i32 = arith.constant 0 : i32
    %c0_i32_0 = arith.constant 0 : i32
    %c0_i32_1 = arith.constant 0 : i32
    return %c0_i32, %c0_i32_0 : i32, i32
  }
  func.func @transform_4(%arg0: i32) -> (i32, i32) {
    %c0_i32 = arith.constant 0 : i32
    %c0_i32_0 = arith.constant 0 : i32
    return %arg0, %c0_i32 : i32, i32
  }
}

</mosaic_0001>

<llo_original>
// kernel: tpu_custom_call.1
$region0: #{tpu_custom_call.1}
  #allocation0 [shape = 'u32[]', space=smem, size = 0x4, offset = 0x4, fixed_abs, tag = 'smem constant byte address 0x4 - core index']
  #allocation1 [shape = 'u32[144,128]{1,0:T(1,128)}', space=vmem, size = 0x12000, scoped, tag = 'internal scratch']
  %s0 = inlined_call_operand.hbm [shape: bf16[16,16,128], index: 0, kind: input, shape index: {}]
  %s1 = inlined_call_operand.hbm [shape: f32[16,16], index: 1, kind: input, shape index: {}]
  %s2 = inlined_call_operand.hbm [shape: bf16[128,128], index: 2, kind: input, shape index: {}]
  %s3 = inlined_call_operand.vmem [shape: f32[1,128], index: 3, kind: input, shape index: {}]
  %s4 = inlined_call_operand.hbm [shape: f32[16,128], index: 4, kind: output, shape index: {}]
  %s5 = sld [smem:[#allocation0]]
  $region61: #{tpu_custom_call.1} parent=0
    _
  %s7 = ssub.s32 1, %s5
  %s8 = scalar_select 0, %s7, %s5
  $region1: #{tpu_custom_call.1} parent=0
    #allocation2 [shape = 'u8[65536]{0}', space=vmem, size = 0x10000, scoped, tag = 'input window, operand 0']
    #allocation3 [shape = 's32[2]{0}', space=sflag, size = 0x8, scoped, tag = 'scoped memory for tpu_custom_call.1']
    #allocation4 [shape = 's32[2]{0}', space=sflag, size = 0x8, scoped, tag = 'scoped memory for tpu_custom_call.1']
    #allocation5 [shape = 'u8[8192]{0}', space=vmem, size = 0x2000, scoped, tag = 'input window, operand 1']
    #allocation6 [shape = 's32[2]{0}', space=sflag, size = 0x8, scoped, tag = 'scoped memory for tpu_custom_call.1']
    #allocation7 [shape = 'u8[32768]{0}', space=vmem, size = 0x8000, scoped, tag = 'input window, operand 2, single buffered']
    #allocation8 [shape = 'u8[8192]{0}', space=vmem, size = 0x2000, scoped, tag = 'output window, operand 0']
    %9 = vsyncpa [#allocation3], 0
    %s10 = scalar_lea.sflag [#allocation3], 1
    %11 = vsyncpa %s10, 0
    %12 = vsyncpa [#allocation6], 0
    %s13 = scalar_lea.sflag [#allocation6], 1
    %14 = vsyncpa %s13, 0
    %15 = vsyncpa [#allocation4], 0
    %s16 = scalar_lea.sflag [#allocation4], 1
    %17 = vsyncpa %s16, 0
    loop: start=0, step=1, limit=4
    $region2: #{tpu_custom_call.1} parent=1 // loop_pre_header
      _
    $region3: #{tpu_custom_call.1} parent=1 // loop_header
      %s19 = sphi 0, %s23
      %p20 = scmp.ge.s32.totalorder %s19, 4
      %s29 = sphi 0, %s31
      %s32 = sphi 0, %s29
      %s33 = sphi 0, %s32
      %s49 = sphi 0, %s33
      %s55 = sphi 0, %s57
      %s58 = sphi 0, %s55
      %s59 = sphi 0, %s58
      %s75 = sphi 0, %s59
      %s79 = sphi 0, %s79
      %s81 = sphi 0, %s79
      %s82 = sphi 0, %s81
      %s96 = sphi 0, %s82
      %s100 = sphi 0, %s100
      %s102 = sphi 0, %s100
      %s103 = sphi 0, %s102
      %s117 = sphi 0, %s103
      %s123 = sphi 0, %s125
      %s126 = sphi 0, %s123
      %s127 = sphi 0, %s126
      %s143 = sphi 0, %s127
    $region4: #{tpu_custom_call.1} parent=1 // loop_header_branch
      %22 = sbr.rel (%p20) target = $region8
    $region5: #{tpu_custom_call.1} parent=1 // loop_body
      %s24 = ssub.s32 %s19, 1
      %s25 = ssub.s32 %s19, 2
      %s26 = sadd.s32 %s19, 1
      %s27 = ssub.s32 %s19, %s26
      %p28 = scmp.eq.s32.totalorder %s27, 0
      %s30 = sadd.s32 %s29, 1
      %s31 = scalar_select %p28, %s29, %s30
      %p34 = pneg %p28
      %p35 = scmp.eq.s32.totalorder %s19, 1
      %p36 = por %p34, %p35
      %p37 = scmp.ne.s32.totalorder %s29, %s32
      %p38 = scmp.eq.s32.totalorder %s19, 0
      %p39 = por %p37, %p38
      %p40 = scmp.ne.s32.totalorder %s29, %s32
      %p41 = scmp.eq.s32.totalorder %s24, 1
      %p42 = por %p40, %p41
      %p43 = scmp.ne.s32.totalorder %s32, %s33
      %p44 = scmp.eq.s32.totalorder %s24, 0
      %p45 = por %p43, %p44
      %p46 = scmp.ne.s32.totalorder %s32, %s33
      %p47 = scmp.eq.s32.totalorder %s25, 1
      %p48 = por %p46, %p47
      %p50 = scmp.ne.s32.totalorder %s33, %s49
      %p51 = scmp.eq.s32.totalorder %s25, 0
      %p52 = por %p50, %p51
      %s53 = ssub.s32 %s19, %s26
      %p54 = scmp.eq.s32.totalorder %s53, 0
      %s56 = sadd.s32 %s55, 1
      %s57 = scalar_select %p54, %s55, %s56
      %p60 = pneg %p54
      %p61 = scmp.eq.s32.totalorder %s19, 1
      %p62 = por %p60, %p61
      %p63 = scmp.ne.s32.totalorder %s55, %s58
      %p64 = scmp.eq.s32.totalorder %s19, 0
      %p65 = por %p63, %p64
      %p66 = scmp.ne.s32.totalorder %s55, %s58
      %p67 = scmp.eq.s32.totalorder %s24, 1
      %p68 = por %p66, %p67
      %p69 = scmp.ne.s32.totalorder %s58, %s59
      %p70 = scmp.eq.s32.totalorder %s24, 0
      %p71 = por %p69, %p70
      %p72 = scmp.ne.s32.totalorder %s58, %s59
      %p73 = scmp.eq.s32.totalorder %s25, 1
      %p74 = por %p72, %p73
      %p76 = scmp.ne.s32.totalorder %s59, %s75
      %p77 = scmp.eq.s32.totalorder %s25, 0
      %p78 = por %p76, %p77
      %s80 = sadd.s32 %s79, 1
      %p83 = scmp.eq.s32.totalorder %s19, 1
      %p84 = scmp.ne.s32.totalorder %s79, %s81
      %p85 = scmp.eq.s32.totalorder %s19, 0
      %p86 = por %p84, %p85
      %p87 = scmp.ne.s32.totalorder %s79, %s81
      %p88 = scmp.eq.s32.totalorder %s24, 1
      %p89 = por %p87, %p88
      %p90 = scmp.ne.s32.totalorder %s81, %s82
      %p91 = scmp.eq.s32.totalorder %s24, 0
      %p92 = por %p90, %p91
      %p93 = scmp.ne.s32.totalorder %s81, %s82
      %p94 = scmp.eq.s32.totalorder %s25, 1
      %p95 = por %p93, %p94
      %p97 = scmp.ne.s32.totalorder %s82, %s96
      %p98 = scmp.eq.s32.totalorder %s25, 0
      %p99 = por %p97, %p98
      %s101 = sadd.s32 %s100, 1
      %p104 = scmp.eq.s32.totalorder %s19, 1
      %p105 = scmp.ne.s32.totalorder %s100, %s102
      %p106 = scmp.eq.s32.totalorder %s19, 0
      %p107 = por %p105, %p106
      %p108 = scmp.ne.s32.totalorder %s100, %s102
      %p109 = scmp.eq.s32.totalorder %s24, 1
      %p110 = por %p108, %p109
      %p111 = scmp.ne.s32.totalorder %s102, %s103
      %p112 = scmp.eq.s32.totalorder %s24, 0
      %p113 = por %p111, %p112
      %p114 = scmp.ne.s32.totalorder %s102, %s103
      %p115 = scmp.eq.s32.totalorder %s25, 1
      %p116 = por %p114, %p115
      %p118 = scmp.ne.s32.totalorder %s103, %s117
      %p119 = scmp.eq.s32.totalorder %s25, 0
      %p120 = por %p118, %p119
      %s121 = ssub.s32 %s19, %s26
      %p122 = scmp.eq.s32.totalorder %s121, 0
      %s124 = sadd.s32 %s123, 1
      %s125 = scalar_select %p122, %s123, %s124
      %p128 = pneg %p122
      %p129 = scmp.eq.s32.totalorder %s19, 1
      %p130 = por %p128, %p129
      %p131 = scmp.ne.s32.totalorder %s123, %s126
      %p132 = scmp.eq.s32.totalorder %s19, 0
      %p133 = por %p131, %p132
      %p134 = scmp.ne.s32.totalorder %s123, %s126
      %p135 = scmp.eq.s32.totalorder %s24, 1
      %p136 = por %p134, %p135
      %p137 = scmp.ne.s32.totalorder %s126, %s127
      %p138 = scmp.eq.s32.totalorder %s24, 0
      %p139 = por %p137, %p138
      %p140 = scmp.ne.s32.totalorder %s126, %s127
      %p141 = scmp.eq.s32.totalorder %s25, 1
      %p142 = por %p140, %p141
      %p144 = scmp.ne.s32.totalorder %s127, %s143
      %p145 = scmp.eq.s32.totalorder %s25, 0
      %p146 = por %p144, %p145
      %p147 = scmp.le.s32.totalorder 1, %s19
      %p148 = scmp.lt.s32.totalorder %s19, 3
      %p149 = pnand %p147, %p148
      %p150 = pneg %p149
      // Predicated region
      $region9: #{tpu_custom_call.1} parent=5 // pred_check
        _
      $region10: #{tpu_custom_call.1} parent=5 // pred_check_branch
        %152 = sbr.rel (%p149) target = $region12
      $region11: #{tpu_custom_call.1} parent=5 // pred_region
        %s153 = ssub.s32 %s19, 1
        // Predicated region
        $region13: #{tpu_custom_call.1} parent=11 // pred_check
          %p154 = pneg %p92
        $region14: #{tpu_custom_call.1} parent=11 // pred_check_branch
          %156 = sbr.rel (%p154) target = $region16
        $region15: #{tpu_custom_call.1} parent=11 // pred_region
          %s158 = ssub.s32 1024, 1024
          %159 = vsyncadd [#allocation6], %s158
          %s160 = sshll.u32 [#allocation7], 4
          %s161 = int_to_ptr.vmem [resolvable:$true] %s160
          %166 = dma.hbm_to_vmem [thread:$0]  %s2, 1024, %s161, [#allocation6], 64, 64, 4
        $region16: #{tpu_custom_call.1} parent=11 // pred_fallthru
          _
        // Predicated region
        $region17: #{tpu_custom_call.1} parent=11 // pred_check
          %p167 = pneg %p113
        $region18: #{tpu_custom_call.1} parent=11 // pred_check_branch
          %169 = sbr.rel (%p167) target = $region20
        $region19: #{tpu_custom_call.1} parent=11 // pred_region
          _
        $region20: #{tpu_custom_call.1} parent=11 // pred_fallthru
          _
      $region12: #{tpu_custom_call.1} parent=5 // pred_fallthru
        _
      %p170 = scmp.lt.s32.totalorder %s19, 2
      // Predicated region
      $region21: #{tpu_custom_call.1} parent=5 // pred_check
        %p171 = pneg %p170
      $region22: #{tpu_custom_call.1} parent=5 // pred_check_branch
        %173 = sbr.rel (%p171) target = $region24
      $region23: #{tpu_custom_call.1} parent=5 // pred_region
        // Predicated region
        $region25: #{tpu_custom_call.1} parent=23 // pred_check
          %p174 = pneg %p39
        $region26: #{tpu_custom_call.1} parent=23 // pred_check_branch
          %176 = sbr.rel (%p174) target = $region28
        $region27: #{tpu_custom_call.1} parent=23 // pred_region
          %s177 = sand.u32 %s29, 1
          %s178 = scalar_lea.sflag [#allocation3], %s177
          %s179 = sand.u32 %s29, 1
          %s180 = smul.addr %s179, 64
          %s181 = scalar_lea.vmem [#allocation2], %s180
          %s182 = smul.u32 8, %s19
          %s184 = ssub.s32 1024, 1024
          %185 = vsyncadd %s178, %s184
          %s186 = smul.addr %s182, 2
          %s187 = smul.addr %s186, 64
          %s188 = scalar_lea.hbm %s0, %s187
          %s189 = sshll.u32 %s181, 4
          %s190 = int_to_ptr.vmem [resolvable:$true] %s189
          %195 = dma.hbm_to_vmem [thread:$0]  %s188, 1024, %s190, %s178, 64, 64, 4
        $region28: #{tpu_custom_call.1} parent=23 // pred_fallthru
          _
        // Predicated region
        $region29: #{tpu_custom_call.1} parent=23 // pred_check
          %p196 = pneg %p65
        $region30: #{tpu_custom_call.1} parent=23 // pred_check_branch
          %198 = sbr.rel (%p196) target = $region32
        $region31: #{tpu_custom_call.1} parent=23 // pred_region
          %s199 = sand.u32 %s19, 1
          %s200 = scalar_lea.sflag [#allocation6], %s199
          %s201 = sand.u32 %s55, 1
          %s202 = smul.addr %s201, 8
          %s203 = scalar_lea.vmem [#allocation5], %s202
          %s205 = ssub.s32 128, 128
          %206 = vsyncadd %s200, %s205
          %s207 = smul.addr %s19, 128
          %s208 = scalar_lea.hbm %s1, %s207
          %s210 = sshll.u32 %s203, 4
          %s211 = int_to_ptr.vmem [resolvable:$true] %s210
          %213 = dma.hbm_to_vmem [thread:$0]  %s208, 128, %s211, %s200
        $region32: #{tpu_custom_call.1} parent=23 // pred_fallthru
          _
      $region24: #{tpu_custom_call.1} parent=5 // pred_fallthru
        _
      %p214 = scmp.le.s32.totalorder 1, %s19
      %p215 = scmp.lt.s32.totalorder %s19, 3
      %p216 = pnand %p214, %p215
      %p217 = pneg %p216
      // Predicated region
      $region33: #{tpu_custom_call.1} parent=5 // pred_check
        _
      $region34: #{tpu_custom_call.1} parent=5 // pred_check_branch
        %219 = sbr.rel (%p216) target = $region36
      $region35: #{tpu_custom_call.1} parent=5 // pred_region
        %s220 = ssub.s32 %s19, 1
        %s221 = sand.u32 %s32, 1
        %s222 = scalar_lea.sflag [#allocation3], %s221
        %s223 = sand.u32 %s32, 1
        %s224 = smul.addr %s223, 64
        %s225 = scalar_lea.vmem [#allocation2], %s224
        // Predicated region
        $region37: #{tpu_custom_call.1} parent=35 // pred_check
          %p226 = pneg %p45
        $region38: #{tpu_custom_call.1} parent=35 // pred_check_branch
          %228 = sbr.rel (%p226) target = $region40
        $region39: #{tpu_custom_call.1} parent=35 // pred_region
          %229 = dma.done %s222, 1024
        $region40: #{tpu_custom_call.1} parent=35 // pred_fallthru
          _
        %s230 = sand.u32 %s24, 1
        %s231 = scalar_lea.sflag [#allocation6], %s230
        %s232 = sand.u32 %s58, 1
        %s233 = smul.addr %s232, 8
        %s234 = scalar_lea.vmem [#allocation5], %s233
        // Predicated region
        $region41: #{tpu_custom_call.1} parent=35 // pred_check
          %p235 = pneg %p71
        $region42: #{tpu_custom_call.1} parent=35 // pred_check_branch
          %237 = sbr.rel (%p235) target = $region44
        $region43: #{tpu_custom_call.1} parent=35 // pred_region
          %238 = dma.done %s231, 128
        $region44: #{tpu_custom_call.1} parent=35 // pred_fallthru
          _
        // Predicated region
        $region45: #{tpu_custom_call.1} parent=35 // pred_check
          %p239 = pneg %p92
        $region46: #{tpu_custom_call.1} parent=35 // pred_check_branch
          %241 = sbr.rel (%p239) target = $region48
        $region47: #{tpu_custom_call.1} parent=35 // pred_region
          %242 = dma.done [#allocation6], 1024
        $region48: #{tpu_custom_call.1} parent=35 // pred_fallthru
          _
        %s243 = sand.u32 %s32, 1
        %s244 = scalar_lea.sflag [#allocation3], %s243
        %s245 = sand.u32 %s32, 1
        %s246 = smul.addr %s245, 64
        %s247 = scalar_lea.vmem [#allocation2], %s246
        %p248 = pneg %p45
        %p249 = pneg %p42
        %s250 = sand.u32 %s24, 1
        %s251 = scalar_lea.sflag [#allocation6], %s250
        %s252 = sand.u32 %s58, 1
        %s253 = smul.addr %s252, 8
        %s254 = scalar_lea.vmem [#allocation5], %s253
        %p255 = pneg %p71
        %p256 = pneg %p68
        %p257 = pneg %p92
        %p258 = pneg %p89
        %p259 = pneg %p113
        %p260 = pneg %p110
        %p261 = pneg %p139
        %p262 = pneg %p136
        %s263 = sand.u32 %s126, 1
        %s264 = scalar_lea.sflag [#allocation4], %s263
        %s265 = sand.u32 %s126, 1
        %s266 = smul.addr %s265, 8
        %s267 = scalar_lea.vmem [#allocation8], %s266
        %s268 = smul.u32 8, %s24
        %v270 = vld [vmem:[%s225] sm:$0xf]
        %v271 = vld [vmem:[%s225 + $0x4] sm:$0xf]
        %v272 = vld [vmem:[%s225 + $0x8] sm:$0xf]
        %v273 = vld [vmem:[%s225 + $0xc] sm:$0xf]
        %v274 = vld [vmem:[%s225 + $0x10] sm:$0xf]
        %v275 = vld [vmem:[%s225 + $0x14] sm:$0xf]
        %v276 = vld [vmem:[%s225 + $0x18] sm:$0xf]
        %v277 = vld [vmem:[%s225 + $0x1c] sm:$0xf]
        %v278 = vld [vmem:[%s225 + $0x20] sm:$0xf]
        %v279 = vld [vmem:[%s225 + $0x24] sm:$0xf]
        %v280 = vld [vmem:[%s225 + $0x28] sm:$0xf]
        %v281 = vld [vmem:[%s225 + $0x2c] sm:$0xf]
        %v282 = vld [vmem:[%s225 + $0x30] sm:$0xf]
        %v283 = vld [vmem:[%s225 + $0x34] sm:$0xf]
        %v284 = vld [vmem:[%s225 + $0x38] sm:$0xf]
        %v285 = vld [vmem:[%s225 + $0x3c] sm:$0xf]
        %v286 = vld [vmem:[#allocation7] sm:$0xf]
        %v287 = vld [vmem:[#allocation7 + $0x4] sm:$0xf]
        %v288 = vld [vmem:[#allocation7 + $0x8] sm:$0xf]
        %v289 = vld [vmem:[#allocation7 + $0xc] sm:$0xf]
        %v290 = vld [vmem:[#allocation7 + $0x10] sm:$0xf]
        %v291 = vld [vmem:[#allocation7 + $0x14] sm:$0xf]
        %v292 = vld [vmem:[#allocation7 + $0x18] sm:$0xf]
        %v293 = vld [vmem:[#allocation7 + $0x1c] sm:$0xf]
        %v294 = vld [vmem:[#allocation7 + $0x20] sm:$0xf]
        %v295 = vld [vmem:[#allocation7 + $0x24] sm:$0xf]
        %v296 = vld [vmem:[#allocation7 + $0x28] sm:$0xf]
        %v297 = vld [vmem:[#allocation7 + $0x2c] sm:$0xf]
        %v298 = vld [vmem:[#allocation7 + $0x30] sm:$0xf]
        %v299 = vld [vmem:[#allocation7 + $0x34] sm:$0xf]
        %v300 = vld [vmem:[#allocation7 + $0x38] sm:$0xf]
        %v301 = vld [vmem:[#allocation7 + $0x3c] sm:$0xf]
        %v302 = vld [vmem:[%s3] sm:$0x1]
        %v304 = vlaneseq
        %v305 = vshrl.u32 %v304, 7
        %v306 = vsub.s32 0, %v305
        %v307 = vrot.slane %v302, %v306
        %v325 = vunpack.c.l.b16 %v270
        %v326 = vunpack.c.l.b16 %v271
        %v327 = vunpack.c.l.b16 %v272
        %v328 = vunpack.c.l.b16 %v273
        %v329 = vunpack.c.l.b16 %v274
        %v330 = vunpack.c.l.b16 %v275
        %v331 = vunpack.c.l.b16 %v276
        %v332 = vunpack.c.l.b16 %v277
        %v333 = vunpack.c.l.b16 %v278
        %v334 = vunpack.c.l.b16 %v279
        %v335 = vunpack.c.l.b16 %v280
        %v336 = vunpack.c.l.b16 %v281
        %v337 = vunpack.c.l.b16 %v282
        %v338 = vunpack.c.l.b16 %v283
        %v339 = vunpack.c.l.b16 %v284
        %v340 = vunpack.c.l.b16 %v285
        %v341 = vpack.c.b16 %v326, %v325
        %v342 = vpack.c.b16 %v328, %v327
        %v343 = vpack.c.b16 %v330, %v329
        %v344 = vpack.c.b16 %v332, %v331
        %v345 = vpack.c.b16 %v334, %v333
        %v346 = vpack.c.b16 %v336, %v335
        %v347 = vpack.c.b16 %v338, %v337
        %v348 = vpack.c.b16 %v340, %v339
        %v373 = vunpack.c.l.b16 %v286
        %v374 = vunpack.c.l.b16 %v287
        %v375 = vunpack.c.l.b16 %v288
        %v376 = vunpack.c.l.b16 %v289
        %v377 = vunpack.c.l.b16 %v290
        %v378 = vunpack.c.l.b16 %v291
        %v379 = vunpack.c.l.b16 %v292
        %v380 = vunpack.c.l.b16 %v293
        %v381 = vunpack.c.l.b16 %v294
        %v382 = vunpack.c.l.b16 %v295
        %v383 = vunpack.c.l.b16 %v296
        %v384 = vunpack.c.l.b16 %v297
        %v385 = vunpack.c.l.b16 %v298
        %v386 = vunpack.c.l.b16 %v299
        %v387 = vunpack.c.l.b16 %v300
        %v388 = vunpack.c.l.b16 %v301
        %v389 = vpack.c.b16 %v374, %v373
        %v390 = vpack.c.b16 %v376, %v375
        %v391 = vpack.c.b16 %v378, %v377
        %v392 = vpack.c.b16 %v380, %v379
        %v393 = vpack.c.b16 %v382, %v381
        %v394 = vpack.c.b16 %v384, %v383
        %v395 = vpack.c.b16 %v386, %v385
        %v396 = vpack.c.b16 %v388, %v387
        %405 = vmatprep.subr.bf16.mxu0 0
        %406 = vmatpush1.bf16.msra.mxu0 %v396
        %407 = vmatprep.subr.bf16.mxu0 0
        %408 = vmatpush1.bf16.msra.mxu0 %v395
        %409 = vmatprep.subr.bf16.mxu0 0
        %410 = vmatpush1.bf16.msra.mxu0 %v394
        %411 = vmatprep.subr.bf16.mxu0 0
        %412 = vmatpush1.bf16.msra.mxu0 %v393
        %413 = vmatprep.subr.bf16.mxu0 0
        %414 = vmatpush1.bf16.msra.mxu0 %v392
        %415 = vmatprep.subr.bf16.mxu0 0
        %416 = vmatpush1.bf16.msra.mxu0 %v391
        %417 = vmatprep.subr.bf16.mxu0 0
        %418 = vmatpush1.bf16.msra.mxu0 %v390
        %419 = vmatprep.subr.bf16.mxu0 0
        %420 = vmatpush1.bf16.msra.mxu0 %v389
        %421 = vmatprep.subr.bf16.mxu0 0
        %422 = vmatpush2.bf16.msra.mxu0 0
        %423 = vmatprep.subr.bf16.mxu0 0
        %424 = vmatpush2.bf16.msra.mxu0 0
        %425 = vmatprep.subr.bf16.mxu0 0
        %426 = vmatpush2.bf16.msra.mxu0 0
        %427 = vmatprep.subr.bf16.mxu0 0
        %428 = vmatpush2.bf16.msra.mxu0 0
        %429 = vmatprep.subr.bf16.mxu0 0
        %430 = vmatpush2.bf16.msra.mxu0 0
        %431 = vmatprep.subr.bf16.mxu0 0
        %432 = vmatpush2.bf16.msra.mxu0 0
        %433 = vmatprep.subr.bf16.mxu0 0
        %434 = vmatpush2.bf16.msra.mxu0 0
        %435 = vmatprep.subr.bf16.mxu0 0
        %436 = vmatpush2.bf16.msra.mxu0 0
        %437 = vmatprep.mubr.bf16.mxu0 0
        %438 = vmatmul.mubr.bf16.gmra.mxu0 %v341
        %v439 = vpop.f32.mrf.mxu0
        %v440 = vadd.f32 %v307, %v439
        %v441 = vpop.f32.mrf.mxu0
        %v442 = vpop.f32.mrf.mxu0
        %v443 = vadd.f32 %v307, %v442
        %v444 = vpop.f32.mrf.mxu0
        %445 = vmatprep.mubr.bf16.mxu0 0
        %446 = vmatmul.mubr.bf16.gmra.mxu0 %v342
        %v447 = vpop.f32.mrf.mxu0
        %v448 = vadd.f32 %v307, %v447
        %v449 = vpop.f32.mrf.mxu0
        %v450 = vpop.f32.mrf.mxu0
        %v451 = vadd.f32 %v307, %v450
        %v452 = vpop.f32.mrf.mxu0
        %453 = vmatprep.mubr.bf16.mxu0 0
        %454 = vmatmul.mubr.bf16.gmra.mxu0 %v343
        %v455 = vpop.f32.mrf.mxu0
        %v456 = vadd.f32 %v307, %v455
        %v457 = vpop.f32.mrf.mxu0
        %v458 = vpop.f32.mrf.mxu0
        %v459 = vadd.f32 %v307, %v458
        %v460 = vpop.f32.mrf.mxu0
        %461 = vmatprep.mubr.bf16.mxu0 0
        %462 = vmatmul.mubr.bf16.gmra.mxu0 %v344
        %v463 = vpop.f32.mrf.mxu0
        %v464 = vadd.f32 %v307, %v463
        %v465 = vpop.f32.mrf.mxu0
        %v466 = vpop.f32.mrf.mxu0
        %v467 = vadd.f32 %v307, %v466
        %v468 = vpop.f32.mrf.mxu0
        %469 = vmatprep.mubr.bf16.mxu0 0
        %470 = vmatmul.mubr.bf16.gmra.mxu0 %v345
        %v471 = vpop.f32.mrf.mxu0
        %v472 = vadd.f32 %v307, %v471
        %v473 = vpop.f32.mrf.mxu0
        %v474 = vpop.f32.mrf.mxu0
        %v475 = vadd.f32 %v307, %v474
        %v476 = vpop.f32.mrf.mxu0
        %477 = vmatprep.mubr.bf16.mxu0 0
        %478 = vmatmul.mubr.bf16.gmra.mxu0 %v346
        %v479 = vpop.f32.mrf.mxu0
        %v480 = vadd.f32 %v307, %v479
        %v481 = vpop.f32.mrf.mxu0
        %v482 = vpop.f32.mrf.mxu0
        %v483 = vadd.f32 %v307, %v482
        %v484 = vpop.f32.mrf.mxu0
        %485 = vmatprep.mubr.bf16.mxu0 0
        %486 = vmatmul.mubr.bf16.gmra.mxu0 %v347
        %v487 = vpop.f32.mrf.mxu0
        %v488 = vadd.f32 %v307, %v487
        %v489 = vpop.f32.mrf.mxu0
        %v490 = vpop.f32.mrf.mxu0
        %v491 = vadd.f32 %v307, %v490
        %v492 = vpop.f32.mrf.mxu0
        %493 = vmatprep.mubr.bf16.mxu0 0
        %494 = vmatmul.mubr.bf16.gmra.mxu0 %v348
        %v495 = vpop.f32.mrf.mxu0
        %v496 = vadd.f32 %v307, %v495
        %v497 = vpop.f32.mrf.mxu0
        %v498 = vpop.f32.mrf.mxu0
        %v499 = vadd.f32 %v307, %v498
        %v500 = vpop.f32.mrf.mxu0
        %501 = vdwg.mxu0
        %v502 = vtanh.pop %v440
        %v503 = vtanh.pop %v443
        %v504 = vtanh.pop %v448
        %v505 = vtanh.pop %v451
        %v506 = vtanh.pop %v456
        %v507 = vtanh.pop %v459
        %v508 = vtanh.pop %v464
        %v509 = vtanh.pop %v467
        %v510 = vtanh.pop %v472
        %v511 = vtanh.pop %v475
        %v512 = vtanh.pop %v480
        %v513 = vtanh.pop %v483
        %v514 = vtanh.pop %v488
        %v515 = vtanh.pop %v491
        %v516 = vtanh.pop %v496
        %v517 = vtanh.pop %v499
        %v518 = vld [vmem:[%s234] sm:$0xff]
        %v519 = vlaneseq
        %v520 = vshrl.u32 %v519, 7
        %v521 = vsub.s32 0, %v520
        %v522 = vrot.slane %v518, %v521
        %524 = vbcast.lane.b32.xlu0 %v522, 256
        %v525 = vpop.permute.xlu0 %524
        %s527 = sor.u32 256, 8
        %528 = vbcast.lane.b32.xlu0 %v522, %s527
        %v529 = vpop.permute.xlu0 %528
        %v530 = vlaneseq
        %v531 = vshrl.u32 %v530, 7
        %v532 = vsub.s32 1, %v531
        %v533 = vrot.slane %v518, %v532
        %535 = vbcast.lane.b32.xlu0 %v533, 256
        %v536 = vpop.permute.xlu0 %535
        %s538 = sor.u32 256, 8
        %539 = vbcast.lane.b32.xlu0 %v533, %s538
        %v540 = vpop.permute.xlu0 %539
        %v541 = vlaneseq
        %v542 = vshrl.u32 %v541, 7
        %v543 = vsub.s32 2, %v542
        %v544 = vrot.slane %v518, %v543
        %546 = vbcast.lane.b32.xlu0 %v544, 256
        %v547 = vpop.permute.xlu0 %546
        %s549 = sor.u32 256, 8
        %550 = vbcast.lane.b32.xlu0 %v544, %s549
        %v551 = vpop.permute.xlu0 %550
        %v552 = vlaneseq
        %v553 = vshrl.u32 %v552, 7
        %v554 = vsub.s32 3, %v553
        %v555 = vrot.slane %v518, %v554
        %557 = vbcast.lane.b32.xlu0 %v555, 256
        %v558 = vpop.permute.xlu0 %557
        %s560 = sor.u32 256, 8
        %561 = vbcast.lane.b32.xlu0 %v555, %s560
        %v562 = vpop.permute.xlu0 %561
        %v563 = vlaneseq
        %v564 = vshrl.u32 %v563, 7
        %v565 = vsub.s32 4, %v564
        %v566 = vrot.slane %v518, %v565
        %568 = vbcast.lane.b32.xlu0 %v566, 256
        %v569 = vpop.permute.xlu0 %568
        %s571 = sor.u32 256, 8
        %572 = vbcast.lane.b32.xlu0 %v566, %s571
        %v573 = vpop.permute.xlu0 %572
        %v574 = vlaneseq
        %v575 = vshrl.u32 %v574, 7
        %v576 = vsub.s32 5, %v575
        %v577 = vrot.slane %v518, %v576
        %579 = vbcast.lane.b32.xlu0 %v577, 256
        %v580 = vpop.permute.xlu0 %579
        %s582 = sor.u32 256, 8
        %583 = vbcast.lane.b32.xlu0 %v577, %s582
        %v584 = vpop.permute.xlu0 %583
        %v585 = vlaneseq
        %v586 = vshrl.u32 %v585, 7
        %v587 = vsub.s32 6, %v586
        %v588 = vrot.slane %v518, %v587
        %590 = vbcast.lane.b32.xlu0 %v588, 256
        %v591 = vpop.permute.xlu0 %590
        %s593 = sor.u32 256, 8
        %594 = vbcast.lane.b32.xlu0 %v588, %s593
        %v595 = vpop.permute.xlu0 %594
        %v596 = vlaneseq
        %v597 = vshrl.u32 %v596, 7
        %v598 = vsub.s32 7, %v597
        %v599 = vrot.slane %v518, %v598
        %601 = vbcast.lane.b32.xlu0 %v599, 256
        %v602 = vpop.permute.xlu0 %601
        %s604 = sor.u32 256, 8
        %605 = vbcast.lane.b32.xlu0 %v599, %s604
        %v606 = vpop.permute.xlu0 %605
        %v607 = vmul.f32 %v502, %v525
        %v608 = vmul.f32 %v503, %v529
        %v609 = vmul.f32 %v504, %v536
        %v610 = vmul.f32 %v505, %v540
        %v611 = vmul.f32 %v506, %v547
        %v612 = vmul.f32 %v507, %v551
        %v613 = vmul.f32 %v508, %v558
        %v614 = vmul.f32 %v509, %v562
        %v615 = vmul.f32 %v510, %v569
        %v616 = vmul.f32 %v511, %v573
        %v617 = vmul.f32 %v512, %v580
        %v618 = vmul.f32 %v513, %v584
        %v619 = vmul.f32 %v514, %v591
        %v620 = vmul.f32 %v515, %v595
        %v621 = vmul.f32 %v516, %v602
        %v622 = vmul.f32 %v517, %v606
        %v623 = vadd.f32 %v607, %v608
        %v624 = vrot.slane %v623, 4
        %v625 = vadd.f32 %v623, %v624
        %v626 = vrot.slane %v625, 2
        %v627 = vadd.f32 %v625, %v626
        %v628 = vrot.slane %v627, 1
        %v629 = vadd.f32 %v627, %v628
        %v630 = vadd.f32 %v609, %v610
        %v631 = vrot.slane %v630, 4
        %v632 = vadd.f32 %v630, %v631
        %v633 = vrot.slane %v632, 2
        %v634 = vadd.f32 %v632, %v633
        %v635 = vrot.slane %v634, 1
        %v636 = vadd.f32 %v634, %v635
        %v637 = vadd.f32 %v611, %v612
        %v638 = vrot.slane %v637, 4
        %v639 = vadd.f32 %v637, %v638
        %v640 = vrot.slane %v639, 2
        %v641 = vadd.f32 %v639, %v640
        %v642 = vrot.slane %v641, 1
        %v643 = vadd.f32 %v641, %v642
        %v644 = vadd.f32 %v613, %v614
        %v645 = vrot.slane %v644, 4
        %v646 = vadd.f32 %v644, %v645
        %v647 = vrot.slane %v646, 2
        %v648 = vadd.f32 %v646, %v647
        %v649 = vrot.slane %v648, 1
        %v650 = vadd.f32 %v648, %v649
        %v651 = vadd.f32 %v615, %v616
        %v652 = vrot.slane %v651, 4
        %v653 = vadd.f32 %v651, %v652
        %v654 = vrot.slane %v653, 2
        %v655 = vadd.f32 %v653, %v654
        %v656 = vrot.slane %v655, 1
        %v657 = vadd.f32 %v655, %v656
        %v658 = vadd.f32 %v617, %v618
        %v659 = vrot.slane %v658, 4
        %v660 = vadd.f32 %v658, %v659
        %v661 = vrot.slane %v660, 2
        %v662 = vadd.f32 %v660, %v661
        %v663 = vrot.slane %v662, 1
        %v664 = vadd.f32 %v662, %v663
        %v665 = vadd.f32 %v619, %v620
        %v666 = vrot.slane %v665, 4
        %v667 = vadd.f32 %v665, %v666
        %v668 = vrot.slane %v667, 2
        %v669 = vadd.f32 %v667, %v668
        %v670 = vrot.slane %v669, 1
        %v671 = vadd.f32 %v669, %v670
        %v672 = vadd.f32 %v621, %v622
        %v673 = vrot.slane %v672, 4
        %v674 = vadd.f32 %v672, %v673
        %v675 = vrot.slane %v674, 2
        %v676 = vadd.f32 %v674, %v675
        %v677 = vrot.slane %v676, 1
        %v678 = vadd.f32 %v676, %v677
        %vm679 = vcmask 130048
        %v680 = vsel %vm679, %v518, 0.0
        %681 = vadd.xlane.f32.xlu0 %v680
        %v682 = vpop.xlane.xlu0 %681
        %v683 = vmax.f32 %v682, 1e-09
        %v684 = vrcp.pop %v683
        %v686 = vrot.slane %v684, 1
        %v687 = vrot.slane %v684, 2
        %v688 = vrot.slane %v684, 3
        %v689 = vrot.slane %v684, 4
        %v690 = vrot.slane %v684, 5
        %v691 = vrot.slane %v684, 6
        %v692 = vrot.slane %v684, 7
        %v701 = vmul.f32 %v629, %v684
        %v702 = vmul.f32 %v636, %v686
        %v703 = vmul.f32 %v643, %v687
        %v704 = vmul.f32 %v650, %v688
        %v705 = vmul.f32 %v657, %v689
        %v706 = vmul.f32 %v664, %v690
        %v707 = vmul.f32 %v671, %v691
        %v708 = vmul.f32 %v678, %v692
        %v709 = vmul.f32 %v701, %v701
        %v710 = vmul.f32 %v702, %v702
        %v711 = vmul.f32 %v703, %v703
        %v712 = vmul.f32 %v704, %v704
        %v713 = vmul.f32 %v705, %v705
        %v714 = vmul.f32 %v706, %v706
        %v715 = vmul.f32 %v707, %v707
        %v716 = vmul.f32 %v708, %v708
        %v725 = vrot.slane %v710, 7
        %vm726 = vcmask 1041409
        %v727 = vsel %vm726, %v725, %v709
        %v728 = vrot.slane %v711, 6
        %vm729 = vcmask 1042434
        %v730 = vsel %vm729, %v728, %v727
        %v731 = vrot.slane %v712, 5
        %vm732 = vcmask 1043459
        %v733 = vsel %vm732, %v731, %v730
        %v734 = vrot.slane %v713, 4
        %vm735 = vcmask 1044484
        %v736 = vsel %vm735, %v734, %v733
        %v737 = vrot.slane %v714, 3
        %vm738 = vcmask 1045509
        %v739 = vsel %vm738, %v737, %v736
        %v740 = vrot.slane %v715, 2
        %vm741 = vcmask 1046534
        %v742 = vsel %vm741, %v740, %v739
        %v743 = vrot.slane %v716, 1
        %vm744 = vcmask 1047559
        %v745 = vsel %vm744, %v743, %v742
        %747 = vadd.xlane.f32.xlu0 %v745
        %v748 = vpop.xlane.xlu0 %747
        %v749 = vmax.f32 %v748, 1e-24
        %v750 = vrsqrt.pop %v749
        %v752 = vrot.slane %v750, 1
        %v753 = vrot.slane %v750, 2
        %v754 = vrot.slane %v750, 3
        %v755 = vrot.slane %v750, 4
        %v756 = vrot.slane %v750, 5
        %v757 = vrot.slane %v750, 6
        %v758 = vrot.slane %v750, 7
        %v767 = vmul.f32 %v701, %v750
        %v768 = vmul.f32 %v702, %v752
        %v769 = vmul.f32 %v703, %v753
        %v770 = vmul.f32 %v704, %v754
        %v771 = vmul.f32 %v705, %v755
        %v772 = vmul.f32 %v706, %v756
        %v773 = vmul.f32 %v707, %v757
        %v774 = vmul.f32 %v708, %v758
        %v783 = vrot.slane %v768, 7
        %v784 = vsel %vm726, %v783, %v767
        %v785 = vrot.slane %v769, 6
        %v786 = vsel %vm729, %v785, %v784
        %v787 = vrot.slane %v770, 5
        %v788 = vsel %vm732, %v787, %v786
        %v789 = vrot.slane %v771, 4
        %v790 = vsel %vm735, %v789, %v788
        %v791 = vrot.slane %v772, 3
        %v792 = vsel %vm738, %v791, %v790
        %v793 = vrot.slane %v773, 2
        %v794 = vsel %vm741, %v793, %v792
        %v795 = vrot.slane %v774, 1
        %v796 = vsel %vm744, %v795, %v794
        %798 = vst [vmem:[%s267] sm:$0xff] %v796
        %s799 = sand.u32 %s126, 1
        %s800 = scalar_lea.sflag [#allocation4], %s799
        %s801 = sand.u32 %s126, 1
        %s802 = smul.addr %s801, 8
        %s803 = scalar_lea.vmem [#allocation8], %s802
        // Predicated region
        $region49: #{tpu_custom_call.1} parent=35 // pred_check
          %p804 = pneg %p136
        $region50: #{tpu_custom_call.1} parent=35 // pred_check_branch
          %806 = sbr.rel (%p804) target = $region52
        $region51: #{tpu_custom_call.1} parent=35 // pred_region
          %s808 = ssub.s32 128, 128
          %809 = vsyncadd %s800, %s808
          %s810 = smul.addr %s24, 128
          %s811 = scalar_lea.hbm %s4, %s810
          %s813 = sshll.u32 %s803, 4
          %s814 = int_to_ptr.vmem [resolvable:$true] %s813
          %816 = dma.vmem_to_hbm [thread:$0]  %s814, 128, %s811, %s800
        $region52: #{tpu_custom_call.1} parent=35 // pred_fallthru
          _
      $region36: #{tpu_custom_call.1} parent=5 // pred_fallthru
        _
      %p817 = scmp.le.s32.totalorder 2, %s19
      // Predicated region
      $region53: #{tpu_custom_call.1} parent=5 // pred_check
        %p818 = pneg %p817
      $region54: #{tpu_custom_call.1} parent=5 // pred_check_branch
        %820 = sbr.rel (%p818) target = $region56
      $region55: #{tpu_custom_call.1} parent=5 // pred_region
        %s821 = ssub.s32 %s19, 2
        // Predicated region
        $region57: #{tpu_custom_call.1} parent=55 // pred_check
          %p822 = pneg %p142
        $region58: #{tpu_custom_call.1} parent=55 // pred_check_branch
          %824 = sbr.rel (%p822) target = $region60
        $region59: #{tpu_custom_call.1} parent=55 // pred_region
          %s825 = sand.u32 %s127, 1
          %s826 = scalar_lea.sflag [#allocation4], %s825
          %s827 = sand.u32 %s127, 1
          %s828 = smul.addr %s827, 8
          %s829 = scalar_lea.vmem [#allocation8], %s828
          %830 = dma.done %s826, 128
        $region60: #{tpu_custom_call.1} parent=55 // pred_fallthru
          _
      $region56: #{tpu_custom_call.1} parent=5 // pred_fallthru
        _
    $region6: #{tpu_custom_call.1} parent=1 // loop_footer
      %s23 = sadd.s32 1, %s19
    $region7: #{tpu_custom_call.1} parent=1 // loop_footer_branch
      %18 = sbr.rel target = $region3
    $region8: #{tpu_custom_call.1} parent=1 // loop_exit
      _
    %831 = vsyncpa [#allocation3], 1
    %s832 = scalar_lea.sflag [#allocation3], 1
    %833 = vsyncpa %s832, 1
    %834 = vsyncpa [#allocation6], 1
    %s835 = scalar_lea.sflag [#allocation6], 1
    %836 = vsyncpa %s835, 1
    %837 = vsyncpa [#allocation4], 1
    %s838 = scalar_lea.sflag [#allocation4], 1
    %839 = vsyncpa %s838, 1

// kernel: tpu_custom_call.1
$region0: #{tpu_custom_call.1}
  #allocation0 [shape = 'u32[]', space=smem, size = 0x4, offset = 0x4, fixed_abs, tag = 'smem constant byte address 0x4 - core index']
  #allocation1 [shape = 'u32[144,128]{1,0:T(1,128)}', space=vmem, size = 0x12000, scoped, tag = 'internal scratch']
  %s0 = inlined_call_operand.hbm [shape: bf16[16,16,128], index: 0, kind: input, shape index: {}]
  %s1 = inlined_call_operand.hbm [shape: f32[16,16], index: 1, kind: input, shape index: {}]
  %s2 = inlined_call_operand.hbm [shape: bf16[128,128], index: 2, kind: input, shape index: {}]
  %s3 = inlined_call_operand.vmem [shape: f32[1,128], index: 3, kind: input, shape index: {}]
  %s4 = inlined_call_operand.hbm [shape: f32[16,128], index: 4, kind: output, shape index: {}]
  %s5 = sld [smem:[#allocation0]]
  $region61: #{tpu_custom_call.1} parent=0
    _
  %s7 = ssub.s32 1, %s5
  %s8 = scalar_select 0, %s7, %s5
  $region1: #{tpu_custom_call.1} parent=0
    #allocation2 [shape = 'u8[65536]{0}', space=vmem, size = 0x10000, scoped, tag = 'input window, operand 0']
    #allocation3 [shape = 's32[2]{0}', space=sflag, size = 0x8, scoped, tag = 'scoped memory for tpu_custom_call.1']
    #allocation4 [shape = 's32[2]{0}', space=sflag, size = 0x8, scoped, tag = 'scoped memory for tpu_custom_call.1']
    #allocation5 [shape = 'u8[8192]{0}', space=vmem, size = 0x2000, scoped, tag = 'input window, operand 1']
    #allocation6 [shape = 's32[2]{0}', space=sflag, size = 0x8, scoped, tag = 'scoped memory for tpu_custom_call.1']
    #allocation7 [shape = 'u8[32768]{0}', space=vmem, size = 0x8000, scoped, tag = 'input window, operand 2, single buffered']
    #allocation8 [shape = 'u8[8192]{0}', space=vmem, size = 0x2000, scoped, tag = 'output window, operand 0']
    %9 = vsyncpa [#allocation3], 0
    %s10 = scalar_lea.sflag [#allocation3], 1
    %11 = vsyncpa %s10, 0
    %12 = vsyncpa [#allocation6], 0
    %s13 = scalar_lea.sflag [#allocation6], 1
    %14 = vsyncpa %s13, 0
    %15 = vsyncpa [#allocation4], 0
    %s16 = scalar_lea.sflag [#allocation4], 1
    %17 = vsyncpa %s16, 0
    loop: start=0, step=1, limit=4
    $region2: #{tpu_custom_call.1} parent=1 // loop_pre_header
      _
    $region3: #{tpu_custom_call.1} parent=1 // loop_header
      %s19 = sphi 0, %s23
      %p20 = scmp.ge.s32.totalorder %s19, 4
      %s29 = sphi 0, %s31
      %s32 = sphi 0, %s29
      %s33 = sphi 0, %s32
      %s49 = sphi 0, %s33
      %s55 = sphi 0, %s57
      %s58 = sphi 0, %s55
      %s59 = sphi 0, %s58
      %s75 = sphi 0, %s59
      %s79 = sphi 0, %s79
      %s81 = sphi 0, %s79
      %s82 = sphi 0, %s81
      %s96 = sphi 0, %s82
      %s100 = sphi 0, %s100
      %s102 = sphi 0, %s100
      %s103 = sphi 0, %s102
      %s117 = sphi 0, %s103
      %s123 = sphi 0, %s125
      %s126 = sphi 0, %s123
      %s127 = sphi 0, %s126
      %s143 = sphi 0, %s127
    $region4: #{tpu_custom_call.1} parent=1 // loop_header_branch
      %22 = sbr.rel (%p20) target = $region8
    $region5: #{tpu_custom_call.1} parent=1 // loop_body
      %s24 = ssub.s32 %s19, 1
      %s25 = ssub.s32 %s19, 2
      %s26 = sadd.s32 %s19, 1
      %s27 = ssub.s32 %s19, %s26
      %p28 = scmp.eq.s32.totalorder %s27, 0
      %s30 = sadd.s32 %s29, 1
      %s31 = scalar_select %p28, %s29, %s30
      %p34 = pneg %p28
      %p35 = scmp.eq.s32.totalorder %s19, 1
      %p36 = por %p34, %p35
      %p37 = scmp.ne.s32.totalorder %s29, %s32
      %p38 = scmp.eq.s32.totalorder %s19, 0
      %p39 = por %p37, %p38
      %p40 = scmp.ne.s32.totalorder %s29, %s32
      %p41 = scmp.eq.s32.totalorder %s24, 1
      %p42 = por %p40, %p41
      %p43 = scmp.ne.s32.totalorder %s32, %s33
      %p44 = scmp.eq.s32.totalorder %s24, 0
      %p45 = por %p43, %p44
      %p46 = scmp.ne.s32.totalorder %s32, %s33
      %p47 = scmp.eq.s32.totalorder %s25, 1
      %p48 = por %p46, %p47
      %p50 = scmp.ne.s32.totalorder %s33, %s49
      %p51 = scmp.eq.s32.totalorder %s25, 0
      %p52 = por %p50, %p51
      %s53 = ssub.s32 %s19, %s26
      %p54 = scmp.eq.s32.totalorder %s53, 0
      %s56 = sadd.s32 %s55, 1
      %s57 = scalar_select %p54, %s55, %s56
      %p60 = pneg %p54
      %p61 = scmp.eq.s32.totalorder %s19, 1
      %p62 = por %p60, %p61
      %p63 = scmp.ne.s32.totalorder %s55, %s58
      %p64 = scmp.eq.s32.totalorder %s19, 0
      %p65 = por %p63, %p64
      %p66 = scmp.ne.s32.totalorder %s55, %s58
      %p67 = scmp.eq.s32.totalorder %s24, 1
      %p68 = por %p66, %p67
      %p69 = scmp.ne.s32.totalorder %s58, %s59
      %p70 = scmp.eq.s32.totalorder %s24, 0
      %p71 = por %p69, %p70
      %p72 = scmp.ne.s32.totalorder %s58, %s59
      %p73 = scmp.eq.s32.totalorder %s25, 1
      %p74 = por %p72, %p73
      %p76 = scmp.ne.s32.totalorder %s59, %s75
      %p77 = scmp.eq.s32.totalorder %s25, 0
      %p78 = por %p76, %p77
      %s80 = sadd.s32 %s79, 1
      %p83 = scmp.eq.s32.totalorder %s19, 1
      %p84 = scmp.ne.s32.totalorder %s79, %s81
      %p85 = scmp.eq.s32.totalorder %s19, 0
      %p86 = por %p84, %p85
      %p87 = scmp.ne.s32.totalorder %s79, %s81
      %p88 = scmp.eq.s32.totalorder %s24, 1
      %p89 = por %p87, %p88
      %p90 = scmp.ne.s32.totalorder %s81, %s82
      %p91 = scmp.eq.s32.totalorder %s24, 0
      %p92 = por %p90, %p91
      %p93 = scmp.ne.s32.totalorder %s81, %s82
      %p94 = scmp.eq.s32.totalorder %s25, 1
      %p95 = por %p93, %p94
      %p97 = scmp.ne.s32.totalorder %s82, %s96
      %p98 = scmp.eq.s32.totalorder %s25, 0
      %p99 = por %p97, %p98
      %s101 = sadd.s32 %s100, 1
      %p104 = scmp.eq.s32.totalorder %s19, 1
      %p105 = scmp.ne.s32.totalorder %s100, %s102
      %p106 = scmp.eq.s32.totalorder %s19, 0
      %p107 = por %p105, %p106
      %p108 = scmp.ne.s32.totalorder %s100, %s102
      %p109 = scmp.eq.s32.totalorder %s24, 1
      %p110 = por %p108, %p109
      %p111 = scmp.ne.s32.totalorder %s102, %s103
      %p112 = scmp.eq.s32.totalorder %s24, 0
      %p113 = por %p111, %p112
      %p114 = scmp.ne.s32.totalorder %s102, %s103
      %p115 = scmp.eq.s32.totalorder %s25, 1
      %p116 = por %p114, %p115
      %p118 = scmp.ne.s32.totalorder %s103, %s117
      %p119 = scmp.eq.s32.totalorder %s25, 0
      %p120 = por %p118, %p119
      %s121 = ssub.s32 %s19, %s26
      %p122 = scmp.eq.s32.totalorder %s121, 0
      %s124 = sadd.s32 %s123, 1
      %s125 = scalar_select %p122, %s123, %s124
      %p128 = pneg %p122
      %p129 = scmp.eq.s32.totalorder %s19, 1
      %p130 = por %p128, %p129
      %p131 = scmp.ne.s32.totalorder %s123, %s126
      %p132 = scmp.eq.s32.totalorder %s19, 0
      %p133 = por %p131, %p132
      %p134 = scmp.ne.s32.totalorder %s123, %s126
      %p135 = scmp.eq.s32.totalorder %s24, 1
      %p136 = por %p134, %p135
      %p137 = scmp.ne.s32.totalorder %s126, %s127
      %p138 = scmp.eq.s32.totalorder %s24, 0
      %p139 = por %p137, %p138
      %p140 = scmp.ne.s32.totalorder %s126, %s127
      %p141 = scmp.eq.s32.totalorder %s25, 1
      %p142 = por %p140, %p141
      %p144 = scmp.ne.s32.totalorder %s127, %s143
      %p145 = scmp.eq.s32.totalorder %s25, 0
      %p146 = por %p144, %p145
      %p147 = scmp.le.s32.totalorder 1, %s19
      %p148 = scmp.lt.s32.totalorder %s19, 3
      %p149 = pnand %p147, %p148
      %p150 = pneg %p149
      // Predicated region
      $region9: #{tpu_custom_call.1} parent=5 // pred_check
        _
      $region10: #{tpu_custom_call.1} parent=5 // pred_check_branch
        %152 = sbr.rel (%p149) target = $region12
      $region11: #{tpu_custom_call.1} parent=5 // pred_region
        %s153 = ssub.s32 %s19, 1
        // Predicated region
        $region13: #{tpu_custom_call.1} parent=11 // pred_check
          %p154 = pneg %p92
        $region14: #{tpu_custom_call.1} parent=11 // pred_check_branch
          %156 = sbr.rel (%p154) target = $region16
        $region15: #{tpu_custom_call.1} parent=11 // pred_region
          %s158 = ssub.s32 1024, 1024
          %159 = vsyncadd [#allocation6], %s158
          %s160 = sshll.u32 [#allocation7], 4
          %s161 = int_to_ptr.vmem [resolvable:$true] %s160
          %166 = dma.hbm_to_vmem [thread:$0]  %s2, 1024, %s161, [#allocation6], 64, 64, 4
        $region16: #{tpu_custom_call.1} parent=11 // pred_fallthru
          _
        // Predicated region
        $region17: #{tpu_custom_call.1} parent=11 // pred_check
          %p167 = pneg %p113
        $region18: #{tpu_custom_call.1} parent=11 // pred_check_branch
          %169 = sbr.rel (%p167) target = $region20
        $region19: #{tpu_custom_call.1} parent=11 // pred_region
          _
        $region20: #{tpu_custom_call.1} parent=11 // pred_fallthru
          _
      $region12: #{tpu_custom_call.1} parent=5 // pred_fallthru
        _
      %p170 = scmp.lt.s32.totalorder %s19, 2
      // Predicated region
      $region21: #{tpu_custom_call.1} parent=5 // pred_check
        %p171 = pneg %p170
      $region22: #{tpu_custom_call.1} parent=5 // pred_check_branch
        %173 = sbr.rel (%p171) target = $region24
      $region23: #{tpu_custom_call.1} parent=5 // pred_region
        // Predicated region
        $region25: #{tpu_custom_call.1} parent=23 // pred_check
          %p174 = pneg %p39
        $region26: #{tpu_custom_call.1} parent=23 // pred_check_branch
          %176 = sbr.rel (%p174) target = $region28
        $region27: #{tpu_custom_call.1} parent=23 // pred_region
          %s177 = sand.u32 %s29, 1
          %s178 = scalar_lea.sflag [#allocation3], %s177
          %s179 = sand.u32 %s29, 1
          %s180 = smul.addr %s179, 64
          %s181 = scalar_lea.vmem [#allocation2], %s180
          %s182 = smul.u32 8, %s19
          %s184 = ssub.s32 1024, 1024
          %185 = vsyncadd %s178, %s184
          %s186 = smul.addr %s182, 2
          %s187 = smul.addr %s186, 64
          %s188 = scalar_lea.hbm %s0, %s187
          %s189 = sshll.u32 %s181, 4
          %s190 = int_to_ptr.vmem [resolvable:$true] %s189
          %195 = dma.hbm_to_vmem [thread:$0]  %s188, 1024, %s190, %s178, 64, 64, 4
        $region28: #{tpu_custom_call.1} parent=23 // pred_fallthru
          _
        // Predicated region
        $region29: #{tpu_custom_call.1} parent=23 // pred_check
          %p196 = pneg %p65
        $region30: #{tpu_custom_call.1} parent=23 // pred_check_branch
          %198 = sbr.rel (%p196) target = $region32
        $region31: #{tpu_custom_call.1} parent=23 // pred_region
          %s199 = sand.u32 %s19, 1
          %s200 = scalar_lea.sflag [#allocation6], %s199
          %s201 = sand.u32 %s55, 1
          %s202 = smul.addr %s201, 8
          %s203 = scalar_lea.vmem [#allocation5], %s202
          %s205 = ssub.s32 128, 128
          %206 = vsyncadd %s200, %s205
          %s207 = smul.addr %s19, 128
          %s208 = scalar_lea.hbm %s1, %s207
          %s210 = sshll.u32 %s203, 4
          %s211 = int_to_ptr.vmem [resolvable:$true] %s210
          %213 = dma.hbm_to_vmem [thread:$0]  %s208, 128, %s211, %s200
        $region32: #{tpu_custom_call.1} parent=23 // pred_fallthru
          _
      $region24: #{tpu_custom_call.1} parent=5 // pred_fallthru
        _
      %p214 = scmp.le.s32.totalorder 1, %s19
      %p215 = scmp.lt.s32.totalorder %s19, 3
      %p216 = pnand %p214, %p215
      %p217 = pneg %p216
      // Predicated region
      $region33: #{tpu_custom_call.1} parent=5 // pred_check
        _
      $region34: #{tpu_custom_call.1} parent=5 // pred_check_branch
        %219 = sbr.rel (%p216) target = $region36
      $region35: #{tpu_custom_call.1} parent=5 // pred_region
        %s220 = ssub.s32 %s19, 1
        %s221 = sand.u32 %s32, 1
        %s222 = scalar_lea.sflag [#allocation3], %s221
        %s223 = sand.u32 %s32, 1
        %s224 = smul.addr %s223, 64
        %s225 = scalar_lea.vmem [#allocation2], %s224
        // Predicated region
        $region37: #{tpu_custom_call.1} parent=35 // pred_check
          %p226 = pneg %p45
        $region38: #{tpu_custom_call.1} parent=35 // pred_check_branch
          %228 = sbr.rel (%p226) target = $region40
        $region39: #{tpu_custom_call.1} parent=35 // pred_region
          %229 = dma.done %s222, 1024
        $region40: #{tpu_custom_call.1} parent=35 // pred_fallthru
          _
        %s230 = sand.u32 %s24, 1
        %s231 = scalar_lea.sflag [#allocation6], %s230
        %s232 = sand.u32 %s58, 1
        %s233 = smul.addr %s232, 8
        %s234 = scalar_lea.vmem [#allocation5], %s233
        // Predicated region
        $region41: #{tpu_custom_call.1} parent=35 // pred_check
          %p235 = pneg %p71
        $region42: #{tpu_custom_call.1} parent=35 // pred_check_branch
          %237 = sbr.rel (%p235) target = $region44
        $region43: #{tpu_custom_call.1} parent=35 // pred_region
          %238 = dma.done %s231, 128
        $region44: #{tpu_custom_call.1} parent=35 // pred_fallthru
          _
        // Predicated region
        $region45: #{tpu_custom_call.1} parent=35 // pred_check
          %p239 = pneg %p92
        $region46: #{tpu_custom_call.1} parent=35 // pred_check_branch
          %241 = sbr.rel (%p239) target = $region48
        $region47: #{tpu_custom_call.1} parent=35 // pred_region
          %242 = dma.done [#allocation6], 1024
        $region48: #{tpu_custom_call.1} parent=35 // pred_fallthru
          _
        %s243 = sand.u32 %s32, 1
        %s244 = scalar_lea.sflag [#allocation3], %s243
        %s245 = sand.u32 %s32, 1
        %s246 = smul.addr %s245, 64
        %s247 = scalar_lea.vmem [#allocation2], %s246
        %p248 = pneg %p45
        %p249 = pneg %p42
        %s250 = sand.u32 %s24, 1
        %s251 = scalar_lea.sflag [#allocation6], %s250
        %s252 = sand.u32 %s58, 1
        %s253 = smul.addr %s252, 8
        %s254 = scalar_lea.vmem [#allocation5], %s253
        %p255 = pneg %p71
        %p256 = pneg %p68
        %p257 = pneg %p92
        %p258 = pneg %p89
        %p259 = pneg %p113
        %p260 = pneg %p110
        %p261 = pneg %p139
        %p262 = pneg %p136
        %s263 = sand.u32 %s126, 1
        %s264 = scalar_lea.sflag [#allocation4], %s263
        %s265 = sand.u32 %s126, 1
        %s266 = smul.addr %s265, 8
        %s267 = scalar_lea.vmem [#allocation8], %s266
        %s268 = smul.u32 8, %s24
        %v270 = vld [vmem:[%s225] sm:$0xf]
        %v271 = vld [vmem:[%s225 + $0x4] sm:$0xf]
        %v272 = vld [vmem:[%s225 + $0x8] sm:$0xf]
        %v273 = vld [vmem:[%s225 + $0xc] sm:$0xf]
        %v274 = vld [vmem:[%s225 + $0x10] sm:$0xf]
        %v275 = vld [vmem:[%s225 + $0x14] sm:$0xf]
        %v276 = vld [vmem:[%s225 + $0x18] sm:$0xf]
        %v277 = vld [vmem:[%s225 + $0x1c] sm:$0xf]
        %v278 = vld [vmem:[%s225 + $0x20] sm:$0xf]
        %v279 = vld [vmem:[%s225 + $0x24] sm:$0xf]
        %v280 = vld [vmem:[%s225 + $0x28] sm:$0xf]
        %v281 = vld [vmem:[%s225 + $0x2c] sm:$0xf]
        %v282 = vld [vmem:[%s225 + $0x30] sm:$0xf]
        %v283 = vld [vmem:[%s225 + $0x34] sm:$0xf]
        %v284 = vld [vmem:[%s225 + $0x38] sm:$0xf]
        %v285 = vld [vmem:[%s225 + $0x3c] sm:$0xf]
        %v286 = vld [vmem:[#allocation7] sm:$0xf]
        %v287 = vld [vmem:[#allocation7 + $0x4] sm:$0xf]
        %v288 = vld [vmem:[#allocation7 + $0x8] sm:$0xf]
        %v289 = vld [vmem:[#allocation7 + $0xc] sm:$0xf]
        %v290 = vld [vmem:[#allocation7 + $0x10] sm:$0xf]
        %v291 = vld [vmem:[#allocation7 + $0x14] sm:$0xf]
        %v292 = vld [vmem:[#allocation7 + $0x18] sm:$0xf]
        %v293 = vld [vmem:[#allocation7 + $0x1c] sm:$0xf]
        %v294 = vld [vmem:[#allocation7 + $0x20] sm:$0xf]
        %v295 = vld [vmem:[#allocation7 + $0x24] sm:$0xf]
        %v296 = vld [vmem:[#allocation7 + $0x28] sm:$0xf]
        %v297 = vld [vmem:[#allocation7 + $0x2c] sm:$0xf]
        %v298 = vld [vmem:[#allocation7 + $0x30] sm:$0xf]
        %v299 = vld [vmem:[#allocation7 + $0x34] sm:$0xf]
        %v300 = vld [vmem:[#allocation7 + $0x38] sm:$0xf]
        %v301 = vld [vmem:[#allocation7 + $0x3c] sm:$0xf]
        %v302 = vld [vmem:[%s3] sm:$0x1]
        %v304 = vlaneseq
        %v305 = vshrl.u32 %v304, 7
        %v306 = vsub.s32 0, %v305
        %v307 = vrot.slane %v302, %v306
        %v325 = vunpack.c.l.b16 %v270
        %v326 = vunpack.c.l.b16 %v271
        %v327 = vunpack.c.l.b16 %v272
        %v328 = vunpack.c.l.b16 %v273
        %v329 = vunpack.c.l.b16 %v274
        %v330 = vunpack.c.l.b16 %v275
        %v331 = vunpack.c.l.b16 %v276
        %v332 = vunpack.c.l.b16 %v277
        %v333 = vunpack.c.l.b16 %v278
        %v334 = vunpack.c.l.b16 %v279
        %v335 = vunpack.c.l.b16 %v280
        %v336 = vunpack.c.l.b16 %v281
        %v337 = vunpack.c.l.b16 %v282
        %v338 = vunpack.c.l.b16 %v283
        %v339 = vunpack.c.l.b16 %v284
        %v340 = vunpack.c.l.b16 %v285
        %v341 = vpack.c.b16 %v326, %v325
        %v342 = vpack.c.b16 %v328, %v327
        %v343 = vpack.c.b16 %v330, %v329
        %v344 = vpack.c.b16 %v332, %v331
        %v345 = vpack.c.b16 %v334, %v333
        %v346 = vpack.c.b16 %v336, %v335
        %v347 = vpack.c.b16 %v338, %v337
        %v348 = vpack.c.b16 %v340, %v339
        %v373 = vunpack.c.l.b16 %v286
        %v374 = vunpack.c.l.b16 %v287
        %v375 = vunpack.c.l.b16 %v288
        %v376 = vunpack.c.l.b16 %v289
        %v377 = vunpack.c.l.b16 %v290
        %v378 = vunpack.c.l.b16 %v291
        %v379 = vunpack.c.l.b16 %v292
        %v380 = vunpack.c.l.b16 %v293
        %v381 = vunpack.c.l.b16 %v294
        %v382 = vunpack.c.l.b16 %v295
        %v383 = vunpack.c.l.b16 %v296
        %v384 = vunpack.c.l.b16 %v297
        %v385 = vunpack.c.l.b16 %v298
        %v386 = vunpack.c.l.b16 %v299
        %v387 = vunpack.c.l.b16 %v300
        %v388 = vunpack.c.l.b16 %v301
        %v389 = vpack.c.b16 %v374, %v373
        %v390 = vpack.c.b16 %v376, %v375
        %v391 = vpack.c.b16 %v378, %v377
        %v392 = vpack.c.b16 %v380, %v379
        %v393 = vpack.c.b16 %v382, %v381
        %v394 = vpack.c.b16 %v384, %v383
        %v395 = vpack.c.b16 %v386, %v385
        %v396 = vpack.c.b16 %v388, %v387
        %405 = vmatprep.subr.bf16.mxu0 0
        %406 = vmatpush1.bf16.msra.mxu0 %v396
        %407 = vmatprep.subr.bf16.mxu0 0
        %408 = vmatpush1.bf16.msra.mxu0 %v395
        %409 = vmatprep.subr.bf16.mxu0 0
        %410 = vmatpush1.bf16.msra.mxu0 %v394
        %411 = vmatprep.subr.bf16.mxu0 0
        %412 = vmatpush1.bf16.msra.mxu0 %v393
        %413 = vmatprep.subr.bf16.mxu0 0
        %414 = vmatpush1.bf16.msra.mxu0 %v392
        %415 = vmatprep.subr.bf16.mxu0 0
        %416 = vmatpush1.bf16.msra.mxu0 %v391
        %417 = vmatprep.subr.bf16.mxu0 0
        %418 = vmatpush1.bf16.msra.mxu0 %v390
        %419 = vmatprep.subr.bf16.mxu0 0
        %420 = vmatpush1.bf16.msra.mxu0 %v389
        %421 = vmatprep.subr.bf16.mxu0 0
        %422 = vmatpush2.bf16.msra.mxu0 0
        %423 = vmatprep.subr.bf16.mxu0 0
        %424 = vmatpush2.bf16.msra.mxu0 0
        %425 = vmatprep.subr.bf16.mxu0 0
        %426 = vmatpush2.bf16.msra.mxu0 0
        %427 = vmatprep.subr.bf16.mxu0 0
        %428 = vmatpush2.bf16.msra.mxu0 0
        %429 = vmatprep.subr.bf16.mxu0 0
        %430 = vmatpush2.bf16.msra.mxu0 0
        %431 = vmatprep.subr.bf16.mxu0 0
        %432 = vmatpush2.bf16.msra.mxu0 0
        %433 = vmatprep.subr.bf16.mxu0 0
        %434 = vmatpush2.bf16.msra.mxu0 0
        %435 = vmatprep.subr.bf16.mxu0 0
        %436 = vmatpush2.bf16.msra.mxu0 0
        %437 = vmatprep.mubr.bf16.mxu0 0
        %438 = vmatmul.mubr.bf16.gmra.mxu0 %v341
        %v439 = vpop.f32.mrf.mxu0
        %v440 = vadd.f32 %v307, %v439
        %v441 = vpop.f32.mrf.mxu0
        %v442 = vpop.f32.mrf.mxu0
        %v443 = vadd.f32 %v307, %v442
        %v444 = vpop.f32.mrf.mxu0
        %445 = vmatprep.mubr.bf16.mxu0 0
        %446 = vmatmul.mubr.bf16.gmra.mxu0 %v342
        %v447 = vpop.f32.mrf.mxu0
        %v448 = vadd.f32 %v307, %v447
        %v449 = vpop.f32.mrf.mxu0
        %v450 = vpop.f32.mrf.mxu0
        %v451 = vadd.f32 %v307, %v450
        %v452 = vpop.f32.mrf.mxu0
        %453 = vmatprep.mubr.bf16.mxu0 0
        %454 = vmatmul.mubr.bf16.gmra.mxu0 %v343
        %v455 = vpop.f32.mrf.mxu0
        %v456 = vadd.f32 %v307, %v455
        %v457 = vpop.f32.mrf.mxu0
        %v458 = vpop.f32.mrf.mxu0
        %v459 = vadd.f32 %v307, %v458
        %v460 = vpop.f32.mrf.mxu0
        %461 = vmatprep.mubr.bf16.mxu0 0
        %462 = vmatmul.mubr.bf16.gmra.mxu0 %v344
        %v463 = vpop.f32.mrf.mxu0
        %v464 = vadd.f32 %v307, %v463
        %v465 = vpop.f32.mrf.mxu0
        %v466 = vpop.f32.mrf.mxu0
        %v467 = vadd.f32 %v307, %v466
        %v468 = vpop.f32.mrf.mxu0
        %469 = vmatprep.mubr.bf16.mxu0 0
        %470 = vmatmul.mubr.bf16.gmra.mxu0 %v345
        %v471 = vpop.f32.mrf.mxu0
        %v472 = vadd.f32 %v307, %v471
        %v473 = vpop.f32.mrf.mxu0
        %v474 = vpop.f32.mrf.mxu0
        %v475 = vadd.f32 %v307, %v474
        %v476 = vpop.f32.mrf.mxu0
        %477 = vmatprep.mubr.bf16.mxu0 0
        %478 = vmatmul.mubr.bf16.gmra.mxu0 %v346
        %v479 = vpop.f32.mrf.mxu0
        %v480 = vadd.f32 %v307, %v479
        %v481 = vpop.f32.mrf.mxu0
        %v482 = vpop.f32.mrf.mxu0
        %v483 = vadd.f32 %v307, %v482
        %v484 = vpop.f32.mrf.mxu0
        %485 = vmatprep.mubr.bf16.mxu0 0
        %486 = vmatmul.mubr.bf16.gmra.mxu0 %v347
        %v487 = vpop.f32.mrf.mxu0
        %v488 = vadd.f32 %v307, %v487
        %v489 = vpop.f32.mrf.mxu0
        %v490 = vpop.f32.mrf.mxu0
        %v491 = vadd.f32 %v307, %v490
        %v492 = vpop.f32.mrf.mxu0
        %493 = vmatprep.mubr.bf16.mxu0 0
        %494 = vmatmul.mubr.bf16.gmra.mxu0 %v348
        %v495 = vpop.f32.mrf.mxu0
        %v496 = vadd.f32 %v307, %v495
        %v497 = vpop.f32.mrf.mxu0
        %v498 = vpop.f32.mrf.mxu0
        %v499 = vadd.f32 %v307, %v498
        %v500 = vpop.f32.mrf.mxu0
        %501 = vdwg.mxu0
        %v502 = vtanh.pop %v440
        %v503 = vtanh.pop %v443
        %v504 = vtanh.pop %v448
        %v505 = vtanh.pop %v451
        %v506 = vtanh.pop %v456
        %v507 = vtanh.pop %v459
        %v508 = vtanh.pop %v464
        %v509 = vtanh.pop %v467
        %v510 = vtanh.pop %v472
        %v511 = vtanh.pop %v475
        %v512 = vtanh.pop %v480
        %v513 = vtanh.pop %v483
        %v514 = vtanh.pop %v488
        %v515 = vtanh.pop %v491
        %v516 = vtanh.pop %v496
        %v517 = vtanh.pop %v499
        %v518 = vld [vmem:[%s234] sm:$0xff]
        %v519 = vlaneseq
        %v520 = vshrl.u32 %v519, 7
        %v521 = vsub.s32 0, %v520
        %v522 = vrot.slane %v518, %v521
        %524 = vbcast.lane.b32.xlu0 %v522, 256
        %v525 = vpop.permute.xlu0 %524
        %s527 = sor.u32 256, 8
        %528 = vbcast.lane.b32.xlu0 %v522, %s527
        %v529 = vpop.permute.xlu0 %528
        %v530 = vlaneseq
        %v531 = vshrl.u32 %v530, 7
        %v532 = vsub.s32 1, %v531
        %v533 = vrot.slane %v518, %v532
        %535 = vbcast.lane.b32.xlu0 %v533, 256
        %v536 = vpop.permute.xlu0 %535
        %s538 = sor.u32 256, 8
        %539 = vbcast.lane.b32.xlu0 %v533, %s538
        %v540 = vpop.permute.xlu0 %539
        %v541 = vlaneseq
        %v542 = vshrl.u32 %v541, 7
        %v543 = vsub.s32 2, %v542
        %v544 = vrot.slane %v518, %v543
        %546 = vbcast.lane.b32.xlu0 %v544, 256
        %v547 = vpop.permute.xlu0 %546
        %s549 = sor.u32 256, 8
        %550 = vbcast.lane.b32.xlu0 %v544, %s549
        %v551 = vpop.permute.xlu0 %550
        %v552 = vlaneseq
        %v553 = vshrl.u32 %v552, 7
        %v554 = vsub.s32 3, %v553
        %v555 = vrot.slane %v518, %v554
        %557 = vbcast.lane.b32.xlu0 %v555, 256
        %v558 = vpop.permute.xlu0 %557
        %s560 = sor.u32 256, 8
        %561 = vbcast.lane.b32.xlu0 %v555, %s560
        %v562 = vpop.permute.xlu0 %561
        %v563 = vlaneseq
        %v564 = vshrl.u32 %v563, 7
        %v565 = vsub.s32 4, %v564
        %v566 = vrot.slane %v518, %v565
        %568 = vbcast.lane.b32.xlu0 %v566, 256
        %v569 = vpop.permute.xlu0 %568
        %s571 = sor.u32 256, 8
        %572 = vbcast.lane.b32.xlu0 %v566, %s571
        %v573 = vpop.permute.xlu0 %572
        %v574 = vlaneseq
        %v575 = vshrl.u32 %v574, 7
        %v576 = vsub.s32 5, %v575
        %v577 = vrot.slane %v518, %v576
        %579 = vbcast.lane.b32.xlu0 %v577, 256
        %v580 = vpop.permute.xlu0 %579
        %s582 = sor.u32 256, 8
        %583 = vbcast.lane.b32.xlu0 %v577, %s582
        %v584 = vpop.permute.xlu0 %583
        %v585 = vlaneseq
        %v586 = vshrl.u32 %v585, 7
        %v587 = vsub.s32 6, %v586
        %v588 = vrot.slane %v518, %v587
        %590 = vbcast.lane.b32.xlu0 %v588, 256
        %v591 = vpop.permute.xlu0 %590
        %s593 = sor.u32 256, 8
        %594 = vbcast.lane.b32.xlu0 %v588, %s593
        %v595 = vpop.permute.xlu0 %594
        %v596 = vlaneseq
        %v597 = vshrl.u32 %v596, 7
        %v598 = vsub.s32 7, %v597
        %v599 = vrot.slane %v518, %v598
        %601 = vbcast.lane.b32.xlu0 %v599, 256
        %v602 = vpop.permute.xlu0 %601
        %s604 = sor.u32 256, 8
        %605 = vbcast.lane.b32.xlu0 %v599, %s604
        %v606 = vpop.permute.xlu0 %605
        %v607 = vmul.f32 %v502, %v525
        %v608 = vmul.f32 %v503, %v529
        %v609 = vmul.f32 %v504, %v536
        %v610 = vmul.f32 %v505, %v540
        %v611 = vmul.f32 %v506, %v547
        %v612 = vmul.f32 %v507, %v551
        %v613 = vmul.f32 %v508, %v558
        %v614 = vmul.f32 %v509, %v562
        %v615 = vmul.f32 %v510, %v569
        %v616 = vmul.f32 %v511, %v573
        %v617 = vmul.f32 %v512, %v580
        %v618 = vmul.f32 %v513, %v584
        %v619 = vmul.f32 %v514, %v591
        %v620 = vmul.f32 %v515, %v595
        %v621 = vmul.f32 %v516, %v602
        %v622 = vmul.f32 %v517, %v606
        %v623 = vadd.f32 %v607, %v608
        %v624 = vrot.slane %v623, 4
        %v625 = vadd.f32 %v623, %v624
        %v626 = vrot.slane %v625, 2
        %v627 = vadd.f32 %v625, %v626
        %v628 = vrot.slane %v627, 1
        %v629 = vadd.f32 %v627, %v628
        %v630 = vadd.f32 %v609, %v610
        %v631 = vrot.slane %v630, 4
        %v632 = vadd.f32 %v630, %v631
        %v633 = vrot.slane %v632, 2
        %v634 = vadd.f32 %v632, %v633
        %v635 = vrot.slane %v634, 1
        %v636 = vadd.f32 %v634, %v635
        %v637 = vadd.f32 %v611, %v612
        %v638 = vrot.slane %v637, 4
        %v639 = vadd.f32 %v637, %v638
        %v640 = vrot.slane %v639, 2
        %v641 = vadd.f32 %v639, %v640
        %v642 = vrot.slane %v641, 1
        %v643 = vadd.f32 %v641, %v642
        %v644 = vadd.f32 %v613, %v614
        %v645 = vrot.slane %v644, 4
        %v646 = vadd.f32 %v644, %v645
        %v647 = vrot.slane %v646, 2
        %v648 = vadd.f32 %v646, %v647
        %v649 = vrot.slane %v648, 1
        %v650 = vadd.f32 %v648, %v649
        %v651 = vadd.f32 %v615, %v616
        %v652 = vrot.slane %v651, 4
        %v653 = vadd.f32 %v651, %v652
        %v654 = vrot.slane %v653, 2
        %v655 = vadd.f32 %v653, %v654
        %v656 = vrot.slane %v655, 1
        %v657 = vadd.f32 %v655, %v656
        %v658 = vadd.f32 %v617, %v618
        %v659 = vrot.slane %v658, 4
        %v660 = vadd.f32 %v658, %v659
        %v661 = vrot.slane %v660, 2
        %v662 = vadd.f32 %v660, %v661
        %v663 = vrot.slane %v662, 1
        %v664 = vadd.f32 %v662, %v663
        %v665 = vadd.f32 %v619, %v620
        %v666 = vrot.slane %v665, 4
        %v667 = vadd.f32 %v665, %v666
        %v668 = vrot.slane %v667, 2
        %v669 = vadd.f32 %v667, %v668
        %v670 = vrot.slane %v669, 1
        %v671 = vadd.f32 %v669, %v670
        %v672 = vadd.f32 %v621, %v622
        %v673 = vrot.slane %v672, 4
        %v674 = vadd.f32 %v672, %v673
        %v675 = vrot.slane %v674, 2
        %v676 = vadd.f32 %v674, %v675
        %v677 = vrot.slane %v676, 1
        %v678 = vadd.f32 %v676, %v677
        %vm679 = vcmask 130048
        %v680 = vsel %vm679, %v518, 0.0
        %681 = vadd.xlane.f32.xlu0 %v680
        %v682 = vpop.xlane.xlu0 %681
        %v683 = vmax.f32 %v682, 1e-09
        %v684 = vrcp.pop %v683
        %v686 = vrot.slane %v684, 1
        %v687 = vrot.slane %v684, 2
        %v688 = vrot.slane %v684, 3
        %v689 = vrot.slane %v684, 4
        %v690 = vrot.slane %v684, 5
        %v691 = vrot.slane %v684, 6
        %v692 = vrot.slane %v684, 7
        %v701 = vmul.f32 %v629, %v684
        %v702 = vmul.f32 %v636, %v686
        %v703 = vmul.f32 %v643, %v687
        %v704 = vmul.f32 %v650, %v688
        %v705 = vmul.f32 %v657, %v689
        %v706 = vmul.f32 %v664, %v690
        %v707 = vmul.f32 %v671, %v691
        %v708 = vmul.f32 %v678, %v692
        %v709 = vmul.f32 %v701, %v701
        %v710 = vmul.f32 %v702, %v702
        %v711 = vmul.f32 %v703, %v703
        %v712 = vmul.f32 %v704, %v704
        %v713 = vmul.f32 %v705, %v705
        %v714 = vmul.f32 %v706, %v706
        %v715 = vmul.f32 %v707, %v707
        %v716 = vmul.f32 %v708, %v708
        %v725 = vrot.slane %v710, 7
        %vm726 = vcmask 1041409
        %v727 = vsel %vm726, %v725, %v709
        %v728 = vrot.slane %v711, 6
        %vm729 = vcmask 1042434
        %v730 = vsel %vm729, %v728, %v727
        %v731 = vrot.slane %v712, 5
        %vm732 = vcmask 1043459
        %v733 = vsel %vm732, %v731, %v730
        %v734 = vrot.slane %v713, 4
        %vm735 = vcmask 1044484
        %v736 = vsel %vm735, %v734, %v733
        %v737 = vrot.slane %v714, 3
        %vm738 = vcmask 1045509
        %v739 = vsel %vm738, %v737, %v736
        %v740 = vrot.slane %v715, 2
        %vm741 = vcmask 1046534
        %v742 = vsel %vm741, %v740, %v739
        %v743 = vrot.slane %v716, 1
        %vm744 = vcmask 1047559
        %v745 = vsel %vm744, %v743, %v742
        %747 = vadd.xlane.f32.xlu0 %v745
        %v748 = vpop.xlane.xlu0 %747
        %v749 = vmax.f32 %v748, 1e-24
        %v750 = vrsqrt.pop %v749
        %v752 = vrot.slane %v750, 1
        %v753 = vrot.slane %v750, 2
        %v754 = vrot.slane %v750, 3
        %v755 = vrot.slane %v750, 4
        %v756 = vrot.slane %v750, 5
        %v757 = vrot.slane %v750, 6
        %v758 = vrot.slane %v750, 7
        %v767 = vmul.f32 %v701, %v750
        %v768 = vmul.f32 %v702, %v752
        %v769 = vmul.f32 %v703, %v753
        %v770 = vmul.f32 %v704, %v754
        %v771 = vmul.f32 %v705, %v755
        %v772 = vmul.f32 %v706, %v756
        %v773 = vmul.f32 %v707, %v757
        %v774 = vmul.f32 %v708, %v758
        %v783 = vrot.slane %v768, 7
        %v784 = vsel %vm726, %v783, %v767
        %v785 = vrot.slane %v769, 6
        %v786 = vsel %vm729, %v785, %v784
        %v787 = vrot.slane %v770, 5
        %v788 = vsel %vm732, %v787, %v786
        %v789 = vrot.slane %v771, 4
        %v790 = vsel %vm735, %v789, %v788
        %v791 = vrot.slane %v772, 3
        %v792 = vsel %vm738, %v791, %v790
        %v793 = vrot.slane %v773, 2
        %v794 = vsel %vm741, %v793, %v792
        %v795 = vrot.slane %v774, 1
        %v796 = vsel %vm744, %v795, %v794
        %798 = vst [vmem:[%s267] sm:$0xff] %v796
        %s799 = sand.u32 %s126, 1
        %s800 = scalar_lea.sflag [#allocation4], %s799
        %s801 = sand.u32 %s126, 1
        %s802 = smul.addr %s801, 8
        %s803 = scalar_lea.vmem [#allocation8], %s802
        // Predicated region
        $region49: #{tpu_custom_call.1} parent=35 // pred_check
          %p804 = pneg %p136
        $region50: #{tpu_custom_call.1} parent=35 // pred_check_branch
          %806 = sbr.rel (%p804) target = $region52
        $region51: #{tpu_custom_call.1} parent=35 // pred_region
          %s808 = ssub.s32 128, 128
          %809 = vsyncadd %s800, %s808
          %s810 = smul.addr %s24, 128
          %s811 = scalar_lea.hbm %s4, %s810
          %s813 = sshll.u32 %s803, 4
          %s814 = int_to_ptr.vmem [resolvable:$true] %s813
          %816 = dma.vmem_to_hbm [thread:$0]  %s814, 128, %s811, %s800
        $region52: #{tpu_custom_call.1} parent=35 // pred_fallthru
          _
      $region36: #{tpu_custom_call.1} parent=5 // pred_fallthru
        _
      %p817 = scmp.le.s32.totalorder 2, %s19
      // Predicated region
      $region53: #{tpu_custom_call.1} parent=5 // pred_check
        %p818 = pneg %p817
      $region54: #{tpu_custom_call.1} parent=5 // pred_check_branch
        %820 = sbr.rel (%p818) target = $region56
      $region55: #{tpu_custom_call.1} parent=5 // pred_region
        %s821 = ssub.s32 %s19, 2
        // Predicated region
        $region57: #{tpu_custom_call.1} parent=55 // pred_check
          %p822 = pneg %p142
        $region58: #{tpu_custom_call.1} parent=55 // pred_check_branch
          %824 = sbr.rel (%p822) target = $region60
        $region59: #{tpu_custom_call.1} parent=55 // pred_region
          %s825 = sand.u32 %s127, 1
          %s826 = scalar_lea.sflag [#allocation4], %s825
          %s827 = sand.u32 %s127, 1
          %s828 = smul.addr %s827, 8
          %s829 = scalar_lea.vmem [#allocation8], %s828
          %830 = dma.done %s826, 128
        $region60: #{tpu_custom_call.1} parent=55 // pred_fallthru
          _
      $region56: #{tpu_custom_call.1} parent=5 // pred_fallthru
        _
    $region6: #{tpu_custom_call.1} parent=1 // loop_footer
      %s23 = sadd.s32 1, %s19
    $region7: #{tpu_custom_call.1} parent=1 // loop_footer_branch
      %18 = sbr.rel target = $region3
    $region8: #{tpu_custom_call.1} parent=1 // loop_exit
      _
    %831 = vsyncpa [#allocation3], 1
    %s832 = scalar_lea.sflag [#allocation3], 1
    %833 = vsyncpa %s832, 1
    %834 = vsyncpa [#allocation6], 1
    %s835 = scalar_lea.sflag [#allocation6], 1
    %836 = vsyncpa %s835, 1
    %837 = vsyncpa [#allocation4], 1
    %s838 = scalar_lea.sflag [#allocation4], 1
    %839 = vsyncpa %s838, 1

</llo_original>
